<compile_context>
chip_gen: v7x
topology: tpu7x:2x2x1
jax: 0.10.0
libtpu: 0.0.40
codegen_flags: <defaults>
</compile_context>

<pallas_src>
import functools
import math

import jax
import jax.numpy as jnp
from jax.experimental import pallas as pl
from jax.experimental.pallas import tpu as pltpu


def _layernorm(x, gamma, beta, eps=1e-5):
    # x: (N, C) f32; gamma/beta: (1, C) f32. Matches torch.nn.LayerNorm (biased var).
    mu = jnp.mean(x, axis=-1, keepdims=True)
    xc = x - mu
    var = jnp.mean(xc * xc, axis=-1, keepdims=True)
    return xc * jax.lax.rsqrt(var + eps) * gamma + beta


def _gelu_tanh(x):
    # TODO(synk): nn.GELU() default is the exact erf form; tanh approximation is
    # used for guaranteed Mosaic lowering (max abs deviation ~3e-4).
    c = 0.7978845608028654  # sqrt(2/pi)
    return 0.5 * x * (1.0 + jnp.tanh(c * (x + 0.044715 * x * x * x)))


def _tfmr_block_kernel(x_ref, g1_ref, be1_ref, w_qkv_ref, b_qkv_ref,
                       w_proj_ref, b_proj_ref, g2_ref, be2_ref,
                       w_in_ref, b_in_ref, w_out_ref, b_out_ref,
                       o_ref, *, n_head):
    f32, bf16 = jnp.float32, jnp.bfloat16
    B, T, C = x_ref.shape
    H = n_head
    D = C // H
    N = B * T

    # Fold batch into the row (sublane) axis for all per-token ops.
    x = x_ref[...].reshape(N, C)                                      # (N, C) f32

    # ---------------- LayerNorm 1 ----------------
    h1 = _layernorm(x, g1_ref[...], be1_ref[...])
    h1b = h1.astype(bf16)

    # ---------------- QKV projections ----------------
    # Leading-axis weight indexing (no lane-slicing of a (N,3C) result);
    # the 1/sqrt(D) scale is pre-folded into the Q weight/bias in the wrapper.
    q = jnp.dot(h1b, w_qkv_ref[0], preferred_element_type=f32) + b_qkv_ref[0]
    k = jnp.dot(h1b, w_qkv_ref[1], preferred_element_type=f32) + b_qkv_ref[1]
    v = jnp.dot(h1b, w_qkv_ref[2], preferred_element_type=f32) + b_qkv_ref[2]

    def split_heads(t):
        # (N, C) -> (B*H, T, D): one reshape + one leading-dim transpose
        # (single relayout per tensor; no per-head lane slices).
        return t.reshape(B, T, H, D).transpose(0, 2, 1, 3).reshape(B * H, T, D)

    qh = split_heads(q).astype(bf16)
    kh = split_heads(k).astype(bf16)
    vh = split_heads(v).astype(bf16)

    # ---------------- causal attention, batched over (batch, head) ----------------
    att = jnp.einsum('gtd,gsd->gts', qh, kh,
                     preferred_element_type=f32)                      # (B*H, T, T)

    row = jax.lax.broadcasted_iota(jnp.int32, (T, T), 0)
    col = jax.lax.broadcasted_iota(jnp.int32, (T, T), 1)
    # Let jnp.where broadcast the (1, T, T) mask — no materialized (B*H,T,T) bool.
    att = jnp.where((row >= col)[None], att, -jnp.inf)

    m = jnp.max(att, axis=-1, keepdims=True)
    p = jnp.exp(att - m)
    p = p * pl.reciprocal(jnp.sum(p, axis=-1, keepdims=True), approx=True)

    yh = jnp.einsum('gts,gsd->gtd', p.astype(bf16), vh,
                    preferred_element_type=f32)                       # (B*H, T, D)

    # Merge heads back to (N, C) and do one K=C output projection.
    y = yh.reshape(B, H, T, D).transpose(0, 2, 1, 3).reshape(N, C)
    attn_out = jnp.dot(y.astype(bf16), w_proj_ref[...],
                       preferred_element_type=f32) + b_proj_ref[...]  # (N, C)

    x1 = x + attn_out                                                 # residual 1

    # ---------------- LayerNorm 2 + MLP ----------------
    h2 = _layernorm(x1, g2_ref[...], be2_ref[...])
    hid = jnp.dot(h2.astype(bf16), w_in_ref[...],
                  preferred_element_type=f32) + b_in_ref[...]         # (N, 4C)
    hid = _gelu_tanh(hid)
    mlp_out = jnp.dot(hid.astype(bf16), w_out_ref[...],
                      preferred_element_type=f32) + b_out_ref[...]    # (N, C)

    o_ref[...] = (x1 + mlp_out).reshape(B, T, C).astype(o_ref.dtype)  # residual 2


def prepare_params(params, n_head):
    """One-time weight prep (hoisted out of the per-call path; call once & cache).

    torch conventions in `params`: Linear W (out,in), b (out,), LN w/b (C,).
    Produces: transposed (in,out) bf16 weights, QKV packed as (3, C, C) with the
    1/sqrt(D) scale folded into the Q slot, f32 biases/LN params shaped (1, C)."""
    C = params['ln1_w'].shape[0]
    D = C // n_head
    f32, bf16 = jnp.float32, jnp.bfloat16
    scale = 1.0 / math.sqrt(D)

    w_attn, b_attn = params['attn_w'], params['attn_b']               # (3C, C), (3C,)
    w_q, w_k, w_v = w_attn[:C], w_attn[C:2 * C], w_attn[2 * C:]
    b_q, b_k, b_v = b_attn[:C], b_attn[C:2 * C], b_attn[2 * C:]
    w_qkv = jnp.stack([w_q.T * scale, w_k.T, w_v.T]).astype(bf16)     # (3, C, C)
    b_qkv = jnp.stack([b_q * scale, b_k, b_v]).reshape(3, 1, C).astype(f32)

    # TODO(synk): on v7x, cast w_in/w_out to fp8 (bf16 x fp8 MXU) to halve VMEM/DMA.
    return dict(
        g1=params['ln1_w'].reshape(1, C).astype(f32),
        be1=params['ln1_b'].reshape(1, C).astype(f32),
        w_qkv=w_qkv, b_qkv=b_qkv,
        w_proj=params['proj_w'].T.astype(bf16),                       # (C, C)
        b_proj=params['proj_b'].reshape(1, C).astype(f32),
        g2=params['ln2_w'].reshape(1, C).astype(f32),
        be2=params['ln2_b'].reshape(1, C).astype(f32),
        w_in=params['fc_w'].T.astype(bf16),                           # (C, 4C)
        b_in=params['fc_b'].reshape(1, 4 * C).astype(f32),
        w_out=params['out_w'].T.astype(bf16),                         # (4C, C)
        b_out=params['out_b'].reshape(1, C).astype(f32),
    )


def tfmr_block(x, prepped, n_head):
    """Fused transformer block. Single grid step (B folded into the row axis) —
    appropriate for these toy shapes; see header TODO for production tiling."""
    B, T, C = x.shape
    assert C % n_head == 0

    args = (x,
            prepped['g1'], prepped['be1'],
            prepped['w_qkv'], prepped['b_qkv'],
            prepped['w_proj'], prepped['b_proj'],
            prepped['g2'], prepped['be2'],
            prepped['w_in'], prepped['b_in'],
            prepped['w_out'], prepped['b_out'])

    # Explicit VMEM budget from the actual footprint (+ headroom for
    # activations / relayout temporaries), capped under v7x physical VMEM.
    io_bytes = sum(int(a.size) * a.dtype.itemsize for a in args)
    io_bytes += int(x.size) * x.dtype.itemsize
    vmem_limit = int(min(max(4 * io_bytes, 8 << 20), 64 << 20))

    kernel = functools.partial(_tfmr_block_kernel, n_head=n_head)
    return pl.pallas_call(
        kernel,
        out_shape=jax.ShapeDtypeStruct((B, T, C), x.dtype),
        # No grid: whole arrays resident in VMEM, no pipeline double-buffering
        # of grid-invariant weights.
        in_specs=[pl.BlockSpec(memory_space=pltpu.MemorySpace.VMEM)] * len(args),
        out_specs=pl.BlockSpec(memory_space=pltpu.MemorySpace.VMEM),
        compiler_params=pltpu.CompilerParams(vmem_limit_bytes=vmem_limit),
    )(*args)


def _reference(x, params, n_head):
    """Pure-JAX f32 reference mirroring the PyTorch TfmrBlock forward."""
    B, T, C = x.shape
    H, D = n_head, C // n_head

    def layernorm(t, w, b, eps=1e-5):
        mu = t.mean(-1, keepdims=True)
        var = ((t - mu) ** 2).mean(-1, keepdims=True)
        return (t - mu) / jnp.sqrt(var + eps) * w + b

    h = layernorm(x, params['ln1_w'], params['ln1_b'])
    qkv = h @ params['attn_w'].T + params['attn_b']
    q, k, v = jnp.split(qkv, 3, axis=-1)

    def heads(t):
        return t.reshape(B, T, H, D).transpose(0, 2, 1, 3)

    q, k, v = heads(q), heads(k), heads(v)
    att = (q @ k.transpose(0, 1, 3, 2)) * (1.0 / math.sqrt(D))
    mask = jnp.tril(jnp.ones((T, T), dtype=bool))
    att = jnp.where(mask[None, None], att, -jnp.inf)
    att = jax.nn.softmax(att, axis=-1)
    y = (att @ v).transpose(0, 2, 1, 3).reshape(B, T, C)
    y = y @ params['proj_w'].T + params['proj_b']
    x1 = x + y

    h2 = layernorm(x1, params['ln2_w'], params['ln2_b'])
    hid = jax.nn.gelu(h2 @ params['fc_w'].T + params['fc_b'], approximate=False)
    mlp = hid @ params['out_w'].T + params['out_b']
    return x1 + mlp


if __name__ == "__main__":
    # block_size=T=8, in_feats=C=32, n_heads=4, all dropouts 0.0
    B, T, C, H = 2, 8, 32, 4

    key = jax.random.PRNGKey(0)
    keys = jax.random.split(key, 13)

    def linear_params(kw, kb, out_f, in_f):
        bound = 1.0 / math.sqrt(in_f)
        w = jax.random.uniform(kw, (out_f, in_f), minval=-bound, maxval=bound,
                               dtype=jnp.float32)
        b = jax.random.uniform(kb, (out_f,), minval=-bound, maxval=bound,
                               dtype=jnp.float32)
        return w, b

    x = jax.random.normal(keys[0], (B, T, C), dtype=jnp.float32)
    attn_w, attn_b = linear_params(keys[1], keys[2], 3 * C, C)
    proj_w, proj_b = linear_params(keys[3], keys[4], C, C)
    fc_w, fc_b = linear_params(keys[5], keys[6], 4 * C, C)
    out_w, out_b = linear_params(keys[7], keys[8], C, 4 * C)

    params = dict(
        ln1_w=1.0 + 0.1 * jax.random.normal(keys[9], (C,), dtype=jnp.float32),
        ln1_b=0.1 * jax.random.normal(keys[10], (C,), dtype=jnp.float32),
        ln2_w=1.0 + 0.1 * jax.random.normal(keys[11], (C,), dtype=jnp.float32),
        ln2_b=0.1 * jax.random.normal(keys[12], (C,), dtype=jnp.float32),
        attn_w=attn_w, attn_b=attn_b,
        proj_w=proj_w, proj_b=proj_b,
        fc_w=fc_w, fc_b=fc_b,
        out_w=out_w, out_b=out_b,
    )

    # Weight prep done ONCE, outside the forward path.
    prepped = prepare_params(params, n_head=H)

    out = jax.block_until_ready(tfmr_block(x, prepped, n_head=H))
    ref = _reference(x, params, n_head=H)

    assert out.shape == (B, T, C)
    # Tolerance accounts for bf16 MXU operands, approx reciprocal and tanh-GELU
    # vs. the exact f32/erf reference; a logic bug would be ~10x larger.
    assert jnp.allclose(out, ref, atol=1e-1, rtol=5e-2), "mismatch vs reference"

    print("KERNEL_OK")
</pallas_src>

<mosaic_0001>
module attributes {stable_mosaic.version = 11 : i64} {
  func.func @_tfmr_block_kernel(%arg0: memref<2x8x32xf32, #tpu.memory_space<vmem>>, %arg1: memref<1x32xf32, #tpu.memory_space<vmem>>, %arg2: memref<1x32xf32, #tpu.memory_space<vmem>>, %arg3: memref<3x32x32xbf16, #tpu.memory_space<vmem>>, %arg4: memref<3x1x32xf32, #tpu.memory_space<vmem>>, %arg5: memref<32x32xbf16, #tpu.memory_space<vmem>>, %arg6: memref<1x32xf32, #tpu.memory_space<vmem>>, %arg7: memref<1x32xf32, #tpu.memory_space<vmem>>, %arg8: memref<1x32xf32, #tpu.memory_space<vmem>>, %arg9: memref<32x128xbf16, #tpu.memory_space<vmem>>, %arg10: memref<1x128xf32, #tpu.memory_space<vmem>>, %arg11: memref<128x32xbf16, #tpu.memory_space<vmem>>, %arg12: memref<1x32xf32, #tpu.memory_space<vmem>>, %arg13: memref<2x8x32xf32, #tpu.memory_space<vmem>>) attributes {dimension_semantics = [], scalar_prefetch = 0 : i64, scratch_operands = 0 : i64, tpu.core_type = #tpu.core_type<tc>} {
    %c0 = arith.constant 0 : index
    %c0_0 = arith.constant 0 : index
    %c0_1 = arith.constant 0 : index
    %0 = vector.load %arg0[%c0, %c0_0, %c0_1] : memref<2x8x32xf32, #tpu.memory_space<vmem>>, vector<2x8x32xf32>
    %1 = vector.shape_cast %0 : vector<2x8x32xf32> to vector<16x32xf32>
    %c0_2 = arith.constant 0 : index
    %c0_3 = arith.constant 0 : index
    %2 = vector.load %arg1[%c0_2, %c0_3] : memref<1x32xf32, #tpu.memory_space<vmem>>, vector<1x32xf32>
    %c0_4 = arith.constant 0 : index
    %c0_5 = arith.constant 0 : index
    %3 = vector.load %arg2[%c0_4, %c0_5] : memref<1x32xf32, #tpu.memory_space<vmem>>, vector<1x32xf32>
    %cst = arith.constant dense<0.000000e+00> : vector<16xf32>
    %4 = vector.multi_reduction <add>, %1, %cst [1] : vector<16x32xf32> to vector<16xf32>
    %5 = vector.shape_cast %4 : vector<16xf32> to vector<16x1xf32>
    %cst_6 = arith.constant 3.200000e+01 : f32
    %6 = vector.broadcast %cst_6 : f32 to vector<16x1xf32>
    %7 = arith.divf %5, %6 : vector<16x1xf32>
    %8 = vector.broadcast %7 : vector<16x1xf32> to vector<16x32xf32>
    %9 = arith.subf %1, %8 : vector<16x32xf32>
    %10 = arith.mulf %9, %9 : vector<16x32xf32>
    %cst_7 = arith.constant dense<0.000000e+00> : vector<16xf32>
    %11 = vector.multi_reduction <add>, %10, %cst_7 [1] : vector<16x32xf32> to vector<16xf32>
    %12 = vector.shape_cast %11 : vector<16xf32> to vector<16x1xf32>
    %cst_8 = arith.constant 3.200000e+01 : f32
    %13 = vector.broadcast %cst_8 : f32 to vector<16x1xf32>
    %14 = arith.divf %12, %13 : vector<16x1xf32>
    %cst_9 = arith.constant 9.99999974E-6 : f32
    %15 = vector.broadcast %cst_9 : f32 to vector<16x1xf32>
    %16 = arith.addf %14, %15 : vector<16x1xf32>
    %17 = math.rsqrt %16 : vector<16x1xf32>
    %18 = vector.broadcast %17 : vector<16x1xf32> to vector<16x32xf32>
    %19 = arith.mulf %9, %18 : vector<16x32xf32>
    %20 = vector.broadcast %2 : vector<1x32xf32> to vector<16x32xf32>
    %21 = arith.mulf %19, %20 : vector<16x32xf32>
    %22 = vector.broadcast %3 : vector<1x32xf32> to vector<16x32xf32>
    %23 = arith.addf %21, %22 : vector<16x32xf32>
    %24 = arith.truncf %23 : vector<16x32xf32> to vector<16x32xbf16>
    %c0_10 = arith.constant 0 : index
    %c0_11 = arith.constant 0 : index
    %c0_12 = arith.constant 0 : index
    %25 = vector.load %arg3[%c0_10, %c0_11, %c0_12] : memref<3x32x32xbf16, #tpu.memory_space<vmem>>, vector<1x32x32xbf16>
    %26 = vector.shape_cast %25 : vector<1x32x32xbf16> to vector<32x32xbf16>
    %cst_13 = arith.constant dense<0.000000e+00> : vector<16x32xf32>
    %27 = tpu.matmul %24, %26, %cst_13 {dimension_numbers = #tpu.dot_dimension_numbers<[1], [0], [0], [1], [0, 0, 1, 1], [], []>} : vector<16x32xbf16>, vector<32x32xbf16>, vector<16x32xf32> -> vector<16x32xf32>
    %c0_14 = arith.constant 0 : index
    %c0_15 = arith.constant 0 : index
    %c0_16 = arith.constant 0 : index
    %28 = vector.load %arg4[%c0_14, %c0_15, %c0_16] : memref<3x1x32xf32, #tpu.memory_space<vmem>>, vector<1x1x32xf32>
    %29 = vector.shape_cast %28 : vector<1x1x32xf32> to vector<1x32xf32>
    %30 = vector.broadcast %29 : vector<1x32xf32> to vector<16x32xf32>
    %31 = arith.addf %27, %30 : vector<16x32xf32>
    %c1 = arith.constant 1 : index
    %c0_17 = arith.constant 0 : index
    %c0_18 = arith.constant 0 : index
    %32 = vector.load %arg3[%c1, %c0_17, %c0_18] : memref<3x32x32xbf16, #tpu.memory_space<vmem>>, vector<1x32x32xbf16>
    %33 = vector.shape_cast %32 : vector<1x32x32xbf16> to vector<32x32xbf16>
    %cst_19 = arith.constant dense<0.000000e+00> : vector<16x32xf32>
    %34 = tpu.matmul %24, %33, %cst_19 {dimension_numbers = #tpu.dot_dimension_numbers<[1], [0], [0], [1], [0, 0, 1, 1], [], []>} : vector<16x32xbf16>, vector<32x32xbf16>, vector<16x32xf32> -> vector<16x32xf32>
    %c1_20 = arith.constant 1 : index
    %c0_21 = arith.constant 0 : index
    %c0_22 = arith.constant 0 : index
    %35 = vector.load %arg4[%c1_20, %c0_21, %c0_22] : memref<3x1x32xf32, #tpu.memory_space<vmem>>, vector<1x1x32xf32>
    %36 = vector.shape_cast %35 : vector<1x1x32xf32> to vector<1x32xf32>
    %37 = vector.broadcast %36 : vector<1x32xf32> to vector<16x32xf32>
    %38 = arith.addf %34, %37 : vector<16x32xf32>
    %c2 = arith.constant 2 : index
    %c0_23 = arith.constant 0 : index
    %c0_24 = arith.constant 0 : index
    %39 = vector.load %arg3[%c2, %c0_23, %c0_24] : memref<3x32x32xbf16, #tpu.memory_space<vmem>>, vector<1x32x32xbf16>
    %40 = vector.shape_cast %39 : vector<1x32x32xbf16> to vector<32x32xbf16>
    %cst_25 = arith.constant dense<0.000000e+00> : vector<16x32xf32>
    %41 = tpu.matmul %24, %40, %cst_25 {dimension_numbers = #tpu.dot_dimension_numbers<[1], [0], [0], [1], [0, 0, 1, 1], [], []>} : vector<16x32xbf16>, vector<32x32xbf16>, vector<16x32xf32> -> vector<16x32xf32>
    %c2_26 = arith.constant 2 : index
    %c0_27 = arith.constant 0 : index
    %c0_28 = arith.constant 0 : index
    %42 = vector.load %arg4[%c2_26, %c0_27, %c0_28] : memref<3x1x32xf32, #tpu.memory_space<vmem>>, vector<1x1x32xf32>
    %43 = vector.shape_cast %42 : vector<1x1x32xf32> to vector<1x32xf32>
    %44 = vector.broadcast %43 : vector<1x32xf32> to vector<16x32xf32>
    %45 = arith.addf %41, %44 : vector<16x32xf32>
    %46 = vector.shape_cast %31 : vector<16x32xf32> to vector<2x8x4x8xf32>
    %47 = tpu.transpose %46, [0, 2, 1, 3] : vector<2x8x4x8xf32> -> vector<2x4x8x8xf32>
    %48 = vector.shape_cast %47 : vector<2x4x8x8xf32> to vector<8x8x8xf32>
    %49 = arith.truncf %48 : vector<8x8x8xf32> to vector<8x8x8xbf16>
    %50 = vector.shape_cast %38 : vector<16x32xf32> to vector<2x8x4x8xf32>
    %51 = tpu.transpose %50, [0, 2, 1, 3] : vector<2x8x4x8xf32> -> vector<2x4x8x8xf32>
    %52 = vector.shape_cast %51 : vector<2x4x8x8xf32> to vector<8x8x8xf32>
    %53 = arith.truncf %52 : vector<8x8x8xf32> to vector<8x8x8xbf16>
    %54 = vector.shape_cast %45 : vector<16x32xf32> to vector<2x8x4x8xf32>
    %55 = tpu.transpose %54, [0, 2, 1, 3] : vector<2x8x4x8xf32> -> vector<2x4x8x8xf32>
    %56 = vector.shape_cast %55 : vector<2x4x8x8xf32> to vector<8x8x8xf32>
    %57 = arith.truncf %56 : vector<8x8x8xf32> to vector<8x8x8xbf16>
    "tpu.trace_start"() <{level = 10 : i32, message = "gtd,gsd->gts"}> : () -> ()
    %cst_29 = arith.constant dense<0.000000e+00> : vector<8x8x8xf32>
    %58 = tpu.matmul %49, %53, %cst_29 {dimension_numbers = #tpu.dot_dimension_numbers<[2], [2], [1], [1], [0, 0, 0, 1, 1, 1], [0], [0]>} : vector<8x8x8xbf16>, vector<8x8x8xbf16>, vector<8x8x8xf32> -> vector<8x8x8xf32>
    "tpu.trace_stop"() : () -> ()
    %59 = tpu.iota {dimensions = array<i32: 0>} : vector<8x8xi32>
    %60 = tpu.iota {dimensions = array<i32: 1>} : vector<8x8xi32>
    %61 = arith.cmpi sge, %59, %60 : vector<8x8xi32>
    %62 = vector.shape_cast %61 : vector<8x8xi1> to vector<1x8x8xi1>
    %cst_30 = arith.constant 0xFF800000 : f32
    %63 = vector.shape_cast %62 : vector<1x8x8xi1> to vector<1x8x8xi1>
    %64 = vector.broadcast %63 : vector<1x8x8xi1> to vector<8x8x8xi1>
    %65 = vector.broadcast %cst_30 : f32 to vector<8x8x8xf32>
    %66 = arith.select %64, %58, %65 : vector<8x8x8xi1>, vector<8x8x8xf32>
    %cst_31 = arith.constant dense<0xFF800000> : vector<8x8xf32>
    %67 = vector.multi_reduction <maximumf>, %66, %cst_31 [2] : vector<8x8x8xf32> to vector<8x8xf32>
    %68 = vector.shape_cast %67 : vector<8x8xf32> to vector<8x8x1xf32>
    %69 = vector.broadcast %68 : vector<8x8x1xf32> to vector<8x8x8xf32>
    %70 = arith.subf %66, %69 : vector<8x8x8xf32>
    %71 = math.exp %70 : vector<8x8x8xf32>
    %cst_32 = arith.constant dense<0.000000e+00> : vector<8x8xf32>
    %72 = vector.multi_reduction <add>, %71, %cst_32 [2] : vector<8x8x8xf32> to vector<8x8xf32>
    %73 = vector.shape_cast %72 : vector<8x8xf32> to vector<8x8x1xf32>
    %74 = tpu.reciprocal %73 {approx = true} : vector<8x8x1xf32> -> vector<8x8x1xf32>
    %75 = vector.broadcast %74 : vector<8x8x1xf32> to vector<8x8x8xf32>
    %76 = arith.mulf %71, %75 : vector<8x8x8xf32>
    %77 = arith.truncf %76 : vector<8x8x8xf32> to vector<8x8x8xbf16>
    "tpu.trace_start"() <{level = 10 : i32, message = "gts,gsd->gtd"}> : () -> ()
    %cst_33 = arith.constant dense<0.000000e+00> : vector<8x8x8xf32>
    %78 = tpu.matmul %77, %57, %cst_33 {dimension_numbers = #tpu.dot_dimension_numbers<[2], [1], [1], [2], [0, 0, 0, 1, 1, 2], [0], [0]>} : vector<8x8x8xbf16>, vector<8x8x8xbf16>, vector<8x8x8xf32> -> vector<8x8x8xf32>
    "tpu.trace_stop"() : () -> ()
    %79 = vector.shape_cast %78 : vector<8x8x8xf32> to vector<2x4x8x8xf32>
    %80 = tpu.transpose %79, [0, 2, 1, 3] : vector<2x4x8x8xf32> -> vector<2x8x4x8xf32>
    %81 = vector.shape_cast %80 : vector<2x8x4x8xf32> to vector<16x32xf32>
    %82 = arith.truncf %81 : vector<16x32xf32> to vector<16x32xbf16>
    %c0_34 = arith.constant 0 : index
    %c0_35 = arith.constant 0 : index
    %83 = vector.load %arg5[%c0_34, %c0_35] : memref<32x32xbf16, #tpu.memory_space<vmem>>, vector<32x32xbf16>
    %cst_36 = arith.constant dense<0.000000e+00> : vector<16x32xf32>
    %84 = tpu.matmul %82, %83, %cst_36 {dimension_numbers = #tpu.dot_dimension_numbers<[1], [0], [0], [1], [0, 0, 1, 1], [], []>} : vector<16x32xbf16>, vector<32x32xbf16>, vector<16x32xf32> -> vector<16x32xf32>
    %c0_37 = arith.constant 0 : index
    %c0_38 = arith.constant 0 : index
    %85 = vector.load %arg6[%c0_37, %c0_38] : memref<1x32xf32, #tpu.memory_space<vmem>>, vector<1x32xf32>
    %86 = vector.broadcast %85 : vector<1x32xf32> to vector<16x32xf32>
    %87 = arith.addf %84, %86 : vector<16x32xf32>
    %88 = arith.addf %1, %87 : vector<16x32xf32>
    %c0_39 = arith.constant 0 : index
    %c0_40 = arith.constant 0 : index
    %89 = vector.load %arg7[%c0_39, %c0_40] : memref<1x32xf32, #tpu.memory_space<vmem>>, vector<1x32xf32>
    %c0_41 = arith.constant 0 : index
    %c0_42 = arith.constant 0 : index
    %90 = vector.load %arg8[%c0_41, %c0_42] : memref<1x32xf32, #tpu.memory_space<vmem>>, vector<1x32xf32>
    %cst_43 = arith.constant dense<0.000000e+00> : vector<16xf32>
    %91 = vector.multi_reduction <add>, %88, %cst_43 [1] : vector<16x32xf32> to vector<16xf32>
    %92 = vector.shape_cast %91 : vector<16xf32> to vector<16x1xf32>
    %cst_44 = arith.constant 3.200000e+01 : f32
    %93 = vector.broadcast %cst_44 : f32 to vector<16x1xf32>
    %94 = arith.divf %92, %93 : vector<16x1xf32>
    %95 = vector.broadcast %94 : vector<16x1xf32> to vector<16x32xf32>
    %96 = arith.subf %88, %95 : vector<16x32xf32>
    %97 = arith.mulf %96, %96 : vector<16x32xf32>
    %cst_45 = arith.constant dense<0.000000e+00> : vector<16xf32>
    %98 = vector.multi_reduction <add>, %97, %cst_45 [1] : vector<16x32xf32> to vector<16xf32>
    %99 = vector.shape_cast %98 : vector<16xf32> to vector<16x1xf32>
    %cst_46 = arith.constant 3.200000e+01 : f32
    %100 = vector.broadcast %cst_46 : f32 to vector<16x1xf32>
    %101 = arith.divf %99, %100 : vector<16x1xf32>
    %cst_47 = arith.constant 9.99999974E-6 : f32
    %102 = vector.broadcast %cst_47 : f32 to vector<16x1xf32>
    %103 = arith.addf %101, %102 : vector<16x1xf32>
    %104 = math.rsqrt %103 : vector<16x1xf32>
    %105 = vector.broadcast %104 : vector<16x1xf32> to vector<16x32xf32>
    %106 = arith.mulf %96, %105 : vector<16x32xf32>
    %107 = vector.broadcast %89 : vector<1x32xf32> to vector<16x32xf32>
    %108 = arith.mulf %106, %107 : vector<16x32xf32>
    %109 = vector.broadcast %90 : vector<1x32xf32> to vector<16x32xf32>
    %110 = arith.addf %108, %109 : vector<16x32xf32>
    %111 = arith.truncf %110 : vector<16x32xf32> to vector<16x32xbf16>
    %c0_48 = arith.constant 0 : index
    %c0_49 = arith.constant 0 : index
    %112 = vector.load %arg9[%c0_48, %c0_49] : memref<32x128xbf16, #tpu.memory_space<vmem>>, vector<32x128xbf16>
    %cst_50 = arith.constant dense<0.000000e+00> : vector<16x128xf32>
    %113 = tpu.matmul %111, %112, %cst_50 {dimension_numbers = #tpu.dot_dimension_numbers<[1], [0], [0], [1], [0, 0, 1, 1], [], []>} : vector<16x32xbf16>, vector<32x128xbf16>, vector<16x128xf32> -> vector<16x128xf32>
    %c0_51 = arith.constant 0 : index
    %c0_52 = arith.constant 0 : index
    %114 = vector.load %arg10[%c0_51, %c0_52] : memref<1x128xf32, #tpu.memory_space<vmem>>, vector<1x128xf32>
    %115 = vector.broadcast %114 : vector<1x128xf32> to vector<16x128xf32>
    %116 = arith.addf %113, %115 : vector<16x128xf32>
    %cst_53 = arith.constant 5.000000e-01 : f32
    %117 = vector.broadcast %cst_53 : f32 to vector<16x128xf32>
    %118 = arith.mulf %117, %116 : vector<16x128xf32>
    %cst_54 = arith.constant 4.471500e-02 : f32
    %119 = vector.broadcast %cst_54 : f32 to vector<16x128xf32>
    %120 = arith.mulf %119, %116 : vector<16x128xf32>
    %121 = arith.mulf %120, %116 : vector<16x128xf32>
    %122 = arith.mulf %121, %116 : vector<16x128xf32>
    %123 = arith.addf %116, %122 : vector<16x128xf32>
    %cst_55 = arith.constant 0.797884583 : f32
    %124 = vector.broadcast %cst_55 : f32 to vector<16x128xf32>
    %125 = arith.mulf %124, %123 : vector<16x128xf32>
    %126 = math.tanh %125 : vector<16x128xf32>
    %cst_56 = arith.constant 1.000000e+00 : f32
    %127 = vector.broadcast %cst_56 : f32 to vector<16x128xf32>
    %128 = arith.addf %127, %126 : vector<16x128xf32>
    %129 = arith.mulf %118, %128 : vector<16x128xf32>
    %130 = arith.truncf %129 : vector<16x128xf32> to vector<16x128xbf16>
    %c0_57 = arith.constant 0 : index
    %c0_58 = arith.constant 0 : index
    %131 = vector.load %arg11[%c0_57, %c0_58] : memref<128x32xbf16, #tpu.memory_space<vmem>>, vector<128x32xbf16>
    %cst_59 = arith.constant dense<0.000000e+00> : vector<16x32xf32>
    %132 = tpu.matmul %130, %131, %cst_59 {dimension_numbers = #tpu.dot_dimension_numbers<[1], [0], [0], [1], [0, 0, 1, 1], [], []>} : vector<16x128xbf16>, vector<128x32xbf16>, vector<16x32xf32> -> vector<16x32xf32>
    %c0_60 = arith.constant 0 : index
    %c0_61 = arith.constant 0 : index
    %133 = vector.load %arg12[%c0_60, %c0_61] : memref<1x32xf32, #tpu.memory_space<vmem>>, vector<1x32xf32>
    %134 = vector.broadcast %133 : vector<1x32xf32> to vector<16x32xf32>
    %135 = arith.addf %132, %134 : vector<16x32xf32>
    %136 = arith.addf %88, %135 : vector<16x32xf32>
    %137 = vector.shape_cast %136 : vector<16x32xf32> to vector<2x8x32xf32>
    %c0_62 = arith.constant 0 : index
    %c0_63 = arith.constant 0 : index
    %c0_64 = arith.constant 0 : index
    %138 = vector.load %arg13[%c0_62, %c0_63, %c0_64] : memref<2x8x32xf32, #tpu.memory_space<vmem>>, vector<2x8x32xf32>
    tpu.vector_store %arg13[%c0_62, %c0_63, %c0_64], %137 {strides = array<i32>} : memref<2x8x32xf32, #tpu.memory_space<vmem>>, vector<2x8x32xf32>,
    return
  }
}

</mosaic_0001>

<llo_original>
// kernel: tpu_custom_call.1
$region0: #{tpu_custom_call.1}
  #allocation0 [shape = 'u32[]', space=smem, size = 0x4, offset = 0x4, fixed_abs, tag = 'smem constant byte address 0x4 - core index']
  #allocation1 [shape = 'u32[144,128]{1,0:T(1,128)}', space=vmem, size = 0x12000, scoped, tag = 'internal scratch']
  %s0 = inlined_call_operand.vmem [shape: f32[2,8,32], index: 0, kind: input, shape index: {}]
  %s1 = inlined_call_operand.vmem [shape: f32[1,32], index: 1, kind: input, shape index: {}]
  %s2 = inlined_call_operand.vmem [shape: f32[1,32], index: 2, kind: input, shape index: {}]
  %s3 = inlined_call_operand.vmem [shape: bf16[3,32,32], index: 3, kind: input, shape index: {}]
  %s4 = inlined_call_operand.hbm [shape: f32[3,1,32], index: 4, kind: input, shape index: {}]
  %s5 = inlined_call_operand.vmem [shape: bf16[32,32], index: 5, kind: input, shape index: {}]
  %s6 = inlined_call_operand.hbm [shape: f32[1,32], index: 6, kind: input, shape index: {}]
  %s7 = inlined_call_operand.hbm [shape: f32[1,32], index: 7, kind: input, shape index: {}]
  %s8 = inlined_call_operand.hbm [shape: f32[1,32], index: 8, kind: input, shape index: {}]
  %s9 = inlined_call_operand.vmem [shape: bf16[32,128], index: 9, kind: input, shape index: {}]
  %s10 = inlined_call_operand.vmem [shape: f32[1,128], index: 10, kind: input, shape index: {}]
  %s11 = inlined_call_operand.vmem [shape: bf16[128,32], index: 11, kind: input, shape index: {}]
  %s12 = inlined_call_operand.vmem [shape: f32[1,32], index: 12, kind: input, shape index: {}]
  %s13 = inlined_call_operand.hbm [shape: f32[2,8,32], index: 13, kind: output, shape index: {}]
  %s14 = sld [smem:[#allocation0]]
  $region78: #{tpu_custom_call.1} parent=0
    _
  %s16 = ssub.s32 1, %s14
  %s17 = scalar_select 0, %s16, %s14
  $region1: #{tpu_custom_call.1} parent=0
    #allocation2 [shape = 'u8[1536]{0}', space=vmem, size = 0x800, scoped, tag = 'input window, operand 4, single buffered']
    #allocation3 [shape = 's32[1]{0}', space=sflag, size = 0x4, scoped, tag = 'scoped memory for tpu_custom_call.1']
    #allocation4 [shape = 's32[1]{0}', space=sflag, size = 0x4, scoped, tag = 'scoped memory for tpu_custom_call.1']
    #allocation5 [shape = 'u8[512]{0}', space=vmem, size = 0x400, scoped, tag = 'input window, operand 6, single buffered']
    #allocation6 [shape = 's32[1]{0}', space=sflag, size = 0x4, scoped, tag = 'scoped memory for tpu_custom_call.1']
    #allocation7 [shape = 'u8[512]{0}', space=vmem, size = 0x400, scoped, tag = 'input window, operand 7, single buffered']
    #allocation8 [shape = 'u8[512]{0}', space=vmem, size = 0x400, scoped, tag = 'input window, operand 8, single buffered']
    #allocation9 [shape = 's32[1]{0}', space=sflag, size = 0x4, scoped, tag = 'scoped memory for tpu_custom_call.1']
    #allocation10 [shape = 'u8[8192]{0}', space=vmem, size = 0x2000, scoped, tag = 'output window, operand 0, single buffered']
    %18 = vsyncpa [#allocation3], 0
    %19 = vsyncpa [#allocation6], 0
    %20 = vsyncpa [#allocation9], 0
    %21 = vsyncpa [#allocation4], 0
    // Predicated region
    $region2: #{tpu_custom_call.1} parent=1 // pred_check
      _
    $region3: #{tpu_custom_call.1} parent=1 // pred_check_branch
      %23 = sbr.rel (0) target = $region5
    $region4: #{tpu_custom_call.1} parent=1 // pred_region
      _
    $region5: #{tpu_custom_call.1} parent=1 // pred_fallthru
      _
    // Predicated region
    $region6: #{tpu_custom_call.1} parent=1 // pred_check
      _
    $region7: #{tpu_custom_call.1} parent=1 // pred_check_branch
      %25 = sbr.rel (0) target = $region9
    $region8: #{tpu_custom_call.1} parent=1 // pred_region
      _
    $region9: #{tpu_custom_call.1} parent=1 // pred_fallthru
      _
    // Predicated region
    $region10: #{tpu_custom_call.1} parent=1 // pred_check
      _
    $region11: #{tpu_custom_call.1} parent=1 // pred_check_branch
      %27 = sbr.rel (0) target = $region13
    $region12: #{tpu_custom_call.1} parent=1 // pred_region
      _
    $region13: #{tpu_custom_call.1} parent=1 // pred_fallthru
      _
    // Predicated region
    $region14: #{tpu_custom_call.1} parent=1 // pred_check
      _
    $region15: #{tpu_custom_call.1} parent=1 // pred_check_branch
      %29 = sbr.rel (0) target = $region17
    $region16: #{tpu_custom_call.1} parent=1 // pred_region
      _
    $region17: #{tpu_custom_call.1} parent=1 // pred_fallthru
      _
    // Predicated region
    $region18: #{tpu_custom_call.1} parent=1 // pred_check
      _
    $region19: #{tpu_custom_call.1} parent=1 // pred_check_branch
      %31 = sbr.rel (0) target = $region21
    $region20: #{tpu_custom_call.1} parent=1 // pred_region
      %s33 = ssub.s32 48, 48
      %34 = vsyncadd [#allocation3], %s33
      %s35 = sshll.u32 [#allocation2], 4
      %s36 = int_to_ptr.vmem [resolvable:$true] %s35
      %41 = dma.hbm_to_vmem [thread:$0]  %s4, 48, %s36, [#allocation3], 16, 16, 1
    $region21: #{tpu_custom_call.1} parent=1 // pred_fallthru
      _
    // Predicated region
    $region22: #{tpu_custom_call.1} parent=1 // pred_check
      _
    $region23: #{tpu_custom_call.1} parent=1 // pred_check_branch
      %43 = sbr.rel (0) target = $region25
    $region24: #{tpu_custom_call.1} parent=1 // pred_region
      _
    $region25: #{tpu_custom_call.1} parent=1 // pred_fallthru
      _
    // Predicated region
    $region26: #{tpu_custom_call.1} parent=1 // pred_check
      _
    $region27: #{tpu_custom_call.1} parent=1 // pred_check_branch
      %45 = sbr.rel (0) target = $region29
    $region28: #{tpu_custom_call.1} parent=1 // pred_region
      %s47 = ssub.s32 16, 16
      %48 = vsyncadd [#allocation6], %s47
      %s50 = sshll.u32 [#allocation5], 4
      %s51 = int_to_ptr.vmem [resolvable:$true] %s50
      %53 = dma.hbm_to_vmem [thread:$0]  %s6, 16, %s51, [#allocation6]
    $region29: #{tpu_custom_call.1} parent=1 // pred_fallthru
      _
    // Predicated region
    $region30: #{tpu_custom_call.1} parent=1 // pred_check
      _
    $region31: #{tpu_custom_call.1} parent=1 // pred_check_branch
      %55 = sbr.rel (0) target = $region33
    $region32: #{tpu_custom_call.1} parent=1 // pred_region
      %s57 = ssub.s32 16, 16
      %58 = vsyncadd [#allocation6], %s57
      %s60 = sshll.u32 [#allocation7], 4
      %s61 = int_to_ptr.vmem [resolvable:$true] %s60
      %63 = dma.hbm_to_vmem [thread:$0]  %s7, 16, %s61, [#allocation6]
    $region33: #{tpu_custom_call.1} parent=1 // pred_fallthru
      _
    // Predicated region
    $region34: #{tpu_custom_call.1} parent=1 // pred_check
      _
    $region35: #{tpu_custom_call.1} parent=1 // pred_check_branch
      %65 = sbr.rel (0) target = $region37
    $region36: #{tpu_custom_call.1} parent=1 // pred_region
      %s67 = ssub.s32 16, 16
      %68 = vsyncadd [#allocation9], %s67
      %s70 = sshll.u32 [#allocation8], 4
      %s71 = int_to_ptr.vmem [resolvable:$true] %s70
      %73 = dma.hbm_to_vmem [thread:$0]  %s8, 16, %s71, [#allocation9]
    $region37: #{tpu_custom_call.1} parent=1 // pred_fallthru
      _
    // Predicated region
    $region38: #{tpu_custom_call.1} parent=1 // pred_check
      _
    $region39: #{tpu_custom_call.1} parent=1 // pred_check_branch
      %75 = sbr.rel (0) target = $region41
    $region40: #{tpu_custom_call.1} parent=1 // pred_region
      _
    $region41: #{tpu_custom_call.1} parent=1 // pred_fallthru
      _
    // Predicated region
    $region42: #{tpu_custom_call.1} parent=1 // pred_check
      _
    $region43: #{tpu_custom_call.1} parent=1 // pred_check_branch
      %77 = sbr.rel (0) target = $region45
    $region44: #{tpu_custom_call.1} parent=1 // pred_region
      _
    $region45: #{tpu_custom_call.1} parent=1 // pred_fallthru
      _
    // Predicated region
    $region46: #{tpu_custom_call.1} parent=1 // pred_check
      _
    $region47: #{tpu_custom_call.1} parent=1 // pred_check_branch
      %79 = sbr.rel (0) target = $region49
    $region48: #{tpu_custom_call.1} parent=1 // pred_region
      _
    $region49: #{tpu_custom_call.1} parent=1 // pred_fallthru
      _
    // Predicated region
    $region50: #{tpu_custom_call.1} parent=1 // pred_check
      _
    $region51: #{tpu_custom_call.1} parent=1 // pred_check_branch
      %81 = sbr.rel (0) target = $region53
    $region52: #{tpu_custom_call.1} parent=1 // pred_region
      _
    $region53: #{tpu_custom_call.1} parent=1 // pred_fallthru
      _
    // Predicated region
    $region54: #{tpu_custom_call.1} parent=1 // pred_check
      _
    $region55: #{tpu_custom_call.1} parent=1 // pred_check_branch
      %83 = sbr.rel (0) target = $region57
    $region56: #{tpu_custom_call.1} parent=1 // pred_region
      %84 = dma.done [#allocation3], 48
    $region57: #{tpu_custom_call.1} parent=1 // pred_fallthru
      _
    // Predicated region
    $region58: #{tpu_custom_call.1} parent=1 // pred_check
      _
    $region59: #{tpu_custom_call.1} parent=1 // pred_check_branch
      %86 = sbr.rel (0) target = $region61
    $region60: #{tpu_custom_call.1} parent=1 // pred_region
      %87 = dma.done [#allocation6], 16
    $region61: #{tpu_custom_call.1} parent=1 // pred_fallthru
      _
    // Predicated region
    $region62: #{tpu_custom_call.1} parent=1 // pred_check
      _
    $region63: #{tpu_custom_call.1} parent=1 // pred_check_branch
      %89 = sbr.rel (0) target = $region65
    $region64: #{tpu_custom_call.1} parent=1 // pred_region
      %90 = dma.done [#allocation6], 16
    $region65: #{tpu_custom_call.1} parent=1 // pred_fallthru
      _
    // Predicated region
    $region66: #{tpu_custom_call.1} parent=1 // pred_check
      _
    $region67: #{tpu_custom_call.1} parent=1 // pred_check_branch
      %92 = sbr.rel (0) target = $region69
    $region68: #{tpu_custom_call.1} parent=1 // pred_region
      %93 = dma.done [#allocation9], 16
    $region69: #{tpu_custom_call.1} parent=1 // pred_fallthru
      _
    %v95 = vld [vmem:[%s0] sm:$0xff]
    %v96 = vld [vmem:[%s0 + $0x8] sm:$0xff]
    %v97 = vld [vmem:[%s1] sm:$0x1]
    %v98 = vld [vmem:[%s2] sm:$0x1]
    %vm99 = vcmask 261120
    %v100 = vsel %vm99, %v95, 0.0
    %101 = vadd.xlane.f32.xlu0 %v100
    %v102 = vpop.xlane.xlu0 %101
    %v103 = vsel %vm99, %v96, 0.0
    %104 = vadd.xlane.f32.xlu0 %v103
    %v105 = vpop.xlane.xlu0 %104
    %v106 = vrcp.pop 32.0
    %v107 = vmul.f32 %v102, %v106
    %v108 = vmul.f32 %v105, %v106
    %v109 = vsub.f32 %v95, %v107
    %v110 = vsub.f32 %v96, %v108
    %v111 = vmul.f32 %v109, %v109
    %v112 = vmul.f32 %v110, %v110
    %v113 = vsel %vm99, %v111, 0.0
    %114 = vadd.xlane.f32.xlu0 %v113
    %v115 = vpop.xlane.xlu0 %114
    %v116 = vsel %vm99, %v112, 0.0
    %117 = vadd.xlane.f32.xlu0 %v116
    %v118 = vpop.xlane.xlu0 %117
    %v119 = vmul.f32 %v115, %v106
    %v120 = vmul.f32 %v118, %v106
    %v121 = vadd.f32 %v119, 1e-05
    %v122 = vadd.f32 %v120, 1e-05
    %v123 = vrsqrt.pop %v121
    %v124 = vrsqrt.pop %v122
    %v125 = vmul.f32 %v109, %v123
    %v126 = vmul.f32 %v110, %v124
    %v128 = vlaneseq
    %v129 = vshrl.u32 %v128, 7
    %v130 = vsub.s32 0, %v129
    %v131 = vrot.slane %v97, %v130
    %v133 = vmul.f32 %v125, %v131
    %v134 = vmul.f32 %v126, %v131
    %v136 = vlaneseq
    %v137 = vshrl.u32 %v136, 7
    %v138 = vsub.s32 0, %v137
    %v139 = vrot.slane %v98, %v138
    %v141 = vadd.f32 %v133, %v139
    %v142 = vadd.f32 %v134, %v139
    %v143 = vpack.c.bf16 %v142, %v141
    %v144 = vld [vmem:[%s3] sm:$0xf]
    %v145 = vld [vmem:[%s3 + $0x4] sm:$0xf]
    %v146 = vld [vmem:[%s3 + $0x8] sm:$0xf]
    %v147 = vld [vmem:[%s3 + $0xc] sm:$0xf]
    %v148 = vld [vmem:[#allocation2] sm:$0x1]
    %v150 = vlaneseq
    %v151 = vshrl.u32 %v150, 7
    %v152 = vsub.s32 0, %v151
    %v153 = vrot.slane %v148, %v152
    %v159 = vunpack.c.l.b16 %v144
    %v160 = vunpack.c.l.b16 %v145
    %v161 = vunpack.c.l.b16 %v146
    %v162 = vunpack.c.l.b16 %v147
    %v163 = vpack.c.b16 %v160, %v159
    %v164 = vpack.c.b16 %v162, %v161
    %v168 = vsel %vm99, %v143, 0
    %170 = vmatprep.subr.bf16.mxu0 0
    %171 = vmatpush1.bf16.msra.mxu0 %v163
    %172 = vmatprep.subr.bf16.mxu0 0
    %173 = vmatpush1.bf16.msra.mxu0 %v164
    %174 = vmatprep.subr.bf16.mxu0 0
    %175 = vmatpush1.bf16.msra.mxu0 0
    %176 = vmatprep.subr.bf16.mxu0 0
    %177 = vmatpush1.bf16.msra.mxu0 0
    %178 = vmatprep.subr.bf16.mxu0 0
    %179 = vmatpush1.bf16.msra.mxu0 0
    %180 = vmatprep.subr.bf16.mxu0 0
    %181 = vmatpush1.bf16.msra.mxu0 0
    %182 = vmatprep.subr.bf16.mxu0 0
    %183 = vmatpush1.bf16.msra.mxu0 0
    %184 = vmatprep.subr.bf16.mxu0 0
    %185 = vmatpush1.bf16.msra.mxu0 0
    %186 = vmatprep.subr.bf16.mxu0 0
    %187 = vmatpush1.bf16.msra.mxu0 0
    %188 = vmatprep.subr.bf16.mxu0 0
    %189 = vmatpush1.bf16.msra.mxu0 0
    %190 = vmatprep.subr.bf16.mxu0 0
    %191 = vmatpush1.bf16.msra.mxu0 0
    %192 = vmatprep.subr.bf16.mxu0 0
    %193 = vmatpush1.bf16.msra.mxu0 0
    %194 = vmatprep.subr.bf16.mxu0 0
    %195 = vmatpush1.bf16.msra.mxu0 0
    %196 = vmatprep.subr.bf16.mxu0 0
    %197 = vmatpush1.bf16.msra.mxu0 0
    %198 = vmatprep.subr.bf16.mxu0 0
    %199 = vmatpush1.bf16.msra.mxu0 0
    %200 = vmatprep.subr.bf16.mxu0 0
    %201 = vmatpush1.bf16.msra.mxu0 0
    %202 = vmatprep.mubr.bf16.mxu0 0
    %203 = vmatmul.mubr.bf16.gmra.mrb[0].mxu0 %v168
    %v204 = vpop.f32.mrb[0].mxu0
    %v205 = vadd.f32 %v153, %v204
    %v206 = vpop.f32.mrb[0].mxu0
    %v207 = vpop.f32.mrb[0].mxu0
    %v208 = vadd.f32 %v153, %v207
    %v209 = vpop.f32.mrb[0].mxu0
    %210 = vdwg.mxu0
    %s211 = scalar_lea.vmem %s3, 16
    %v212 = vld [vmem:[%s211] sm:$0xf]
    %v213 = vld [vmem:[%s211 + $0x4] sm:$0xf]
    %v214 = vld [vmem:[%s211 + $0x8] sm:$0xf]
    %v215 = vld [vmem:[%s211 + $0xc] sm:$0xf]
    %s216 = scalar_lea.vmem [#allocation2], 1
    %v217 = vld [vmem:[%s216] sm:$0x1]
    %v219 = vlaneseq
    %v220 = vshrl.u32 %v219, 7
    %v221 = vsub.s32 0, %v220
    %v222 = vrot.slane %v217, %v221
    %v228 = vunpack.c.l.b16 %v212
    %v229 = vunpack.c.l.b16 %v213
    %v230 = vunpack.c.l.b16 %v214
    %v231 = vunpack.c.l.b16 %v215
    %v232 = vpack.c.b16 %v229, %v228
    %v233 = vpack.c.b16 %v231, %v230
    %236 = vmatprep.subr.bf16.mxu0 0
    %237 = vmatpush1.bf16.msra.mxu0 %v232
    %238 = vmatprep.subr.bf16.mxu0 0
    %239 = vmatpush1.bf16.msra.mxu0 %v233
    %240 = vmatprep.subr.bf16.mxu0 0
    %241 = vmatpush1.bf16.msra.mxu0 0
    %242 = vmatprep.subr.bf16.mxu0 0
    %243 = vmatpush1.bf16.msra.mxu0 0
    %244 = vmatprep.subr.bf16.mxu0 0
    %245 = vmatpush1.bf16.msra.mxu0 0
    %246 = vmatprep.subr.bf16.mxu0 0
    %247 = vmatpush1.bf16.msra.mxu0 0
    %248 = vmatprep.subr.bf16.mxu0 0
    %249 = vmatpush1.bf16.msra.mxu0 0
    %250 = vmatprep.subr.bf16.mxu0 0
    %251 = vmatpush1.bf16.msra.mxu0 0
    %252 = vmatprep.subr.bf16.mxu0 0
    %253 = vmatpush1.bf16.msra.mxu0 0
    %254 = vmatprep.subr.bf16.mxu0 0
    %255 = vmatpush1.bf16.msra.mxu0 0
    %256 = vmatprep.subr.bf16.mxu0 0
    %257 = vmatpush1.bf16.msra.mxu0 0
    %258 = vmatprep.subr.bf16.mxu0 0
    %259 = vmatpush1.bf16.msra.mxu0 0
    %260 = vmatprep.subr.bf16.mxu0 0
    %261 = vmatpush1.bf16.msra.mxu0 0
    %262 = vmatprep.subr.bf16.mxu0 0
    %263 = vmatpush1.bf16.msra.mxu0 0
    %264 = vmatprep.subr.bf16.mxu0 0
    %265 = vmatpush1.bf16.msra.mxu0 0
    %266 = vmatprep.subr.bf16.mxu0 0
    %267 = vmatpush1.bf16.msra.mxu0 0
    %268 = vmatprep.mubr.bf16.mxu0 0
    %269 = vmatmul.mubr.bf16.gmra.mrb[0].mxu0 %v168
    %v270 = vpop.f32.mrb[0].mxu0
    %v271 = vadd.f32 %v222, %v270
    %v272 = vpop.f32.mrb[0].mxu0
    %v273 = vpop.f32.mrb[0].mxu0
    %v274 = vadd.f32 %v222, %v273
    %v275 = vpop.f32.mrb[0].mxu0
    %276 = vdwg.mxu0
    %s277 = scalar_lea.vmem %s3, 32
    %v278 = vld [vmem:[%s277] sm:$0xf]
    %v279 = vld [vmem:[%s277 + $0x4] sm:$0xf]
    %v280 = vld [vmem:[%s277 + $0x8] sm:$0xf]
    %v281 = vld [vmem:[%s277 + $0xc] sm:$0xf]
    %s282 = scalar_lea.vmem [#allocation2], 2
    %v283 = vld [vmem:[%s282] sm:$0x1]
    %v285 = vlaneseq
    %v286 = vshrl.u32 %v285, 7
    %v287 = vsub.s32 0, %v286
    %v288 = vrot.slane %v283, %v287
    %v294 = vunpack.c.l.b16 %v278
    %v295 = vunpack.c.l.b16 %v279
    %v296 = vunpack.c.l.b16 %v280
    %v297 = vunpack.c.l.b16 %v281
    %v298 = vpack.c.b16 %v295, %v294
    %v299 = vpack.c.b16 %v297, %v296
    %302 = vmatprep.subr.bf16.mxu0 0
    %303 = vmatpush1.bf16.msra.mxu0 %v298
    %304 = vmatprep.subr.bf16.mxu0 0
    %305 = vmatpush1.bf16.msra.mxu0 %v299
    %306 = vmatprep.subr.bf16.mxu0 0
    %307 = vmatpush1.bf16.msra.mxu0 0
    %308 = vmatprep.subr.bf16.mxu0 0
    %309 = vmatpush1.bf16.msra.mxu0 0
    %310 = vmatprep.subr.bf16.mxu0 0
    %311 = vmatpush1.bf16.msra.mxu0 0
    %312 = vmatprep.subr.bf16.mxu0 0
    %313 = vmatpush1.bf16.msra.mxu0 0
    %314 = vmatprep.subr.bf16.mxu0 0
    %315 = vmatpush1.bf16.msra.mxu0 0
    %316 = vmatprep.subr.bf16.mxu0 0
    %317 = vmatpush1.bf16.msra.mxu0 0
    %318 = vmatprep.subr.bf16.mxu0 0
    %319 = vmatpush1.bf16.msra.mxu0 0
    %320 = vmatprep.subr.bf16.mxu0 0
    %321 = vmatpush1.bf16.msra.mxu0 0
    %322 = vmatprep.subr.bf16.mxu0 0
    %323 = vmatpush1.bf16.msra.mxu0 0
    %324 = vmatprep.subr.bf16.mxu0 0
    %325 = vmatpush1.bf16.msra.mxu0 0
    %326 = vmatprep.subr.bf16.mxu0 0
    %327 = vmatpush1.bf16.msra.mxu0 0
    %328 = vmatprep.subr.bf16.mxu0 0
    %329 = vmatpush1.bf16.msra.mxu0 0
    %330 = vmatprep.subr.bf16.mxu0 0
    %331 = vmatpush1.bf16.msra.mxu0 0
    %332 = vmatprep.subr.bf16.mxu0 0
    %333 = vmatpush1.bf16.msra.mxu0 0
    %334 = vmatprep.mubr.bf16.mxu0 0
    %335 = vmatmul.mubr.bf16.gmra.mrb[0].mxu0 %v168
    %v336 = vpop.f32.mrb[0].mxu0
    %v337 = vadd.f32 %v288, %v336
    %v338 = vpop.f32.mrb[0].mxu0
    %v339 = vpop.f32.mrb[0].mxu0
    %v340 = vadd.f32 %v288, %v339
    %v341 = vpop.f32.mrb[0].mxu0
    %342 = vdwg.mxu0
    %345 = vrot.lane.b32.xlu0 %v205, 120
    %v346 = vpop.permute.xlu0 %345
    %347 = vrot.lane.b32.xlu0 %v208, 120
    %v348 = vpop.permute.xlu0 %347
    %351 = vrot.lane.b32.xlu0 %v205, 112
    %v352 = vpop.permute.xlu0 %351
    %353 = vrot.lane.b32.xlu0 %v208, 112
    %v354 = vpop.permute.xlu0 %353
    %357 = vrot.lane.b32.xlu0 %v205, 104
    %v358 = vpop.permute.xlu0 %357
    %359 = vrot.lane.b32.xlu0 %v208, 104
    %v360 = vpop.permute.xlu0 %359
    %v363 = vcombine.low %v205, %v352
    %v364 = vcombine.high %v205, %v352
    %v366 = vunpack.c.l.s4 1983009808
    %v367 = vunpack.c.0.s8 %v366
    %v368 = vlaneseq
    %v369 = vshrl.u32 %v368, 7
    %v370 = vsub.s32 %v367, %v369
    %v371 = vrot.slane %v363, %v370
    %v373 = vunpack.c.l.s4 1983009808
    %v374 = vunpack.c.0.s8 %v373
    %v375 = vlaneseq
    %v376 = vshrl.u32 %v375, 7
    %v377 = vsub.s32 %v374, %v376
    %v378 = vrot.slane %v364, %v377
    %v379 = vcombine.low %v346, %v358
    %v380 = vcombine.high %v346, %v358
    %v382 = vunpack.c.l.s4 1983009808
    %v383 = vunpack.c.0.s8 %v382
    %v384 = vlaneseq
    %v385 = vshrl.u32 %v384, 7
    %v386 = vsub.s32 %v383, %v385
    %v387 = vrot.slane %v379, %v386
    %v389 = vunpack.c.l.s4 1983009808
    %v390 = vunpack.c.0.s8 %v389
    %v391 = vlaneseq
    %v392 = vshrl.u32 %v391, 7
    %v393 = vsub.s32 %v390, %v392
    %v394 = vrot.slane %v380, %v393
    %v395 = vcombine.low %v371, %v387
    %v396 = vcombine.high %v371, %v387
    %v398 = vunpack.c.l.s4 1934713408
    %v399 = vunpack.c.0.s8 %v398
    %v400 = vlaneseq
    %v401 = vshrl.u32 %v400, 7
    %v402 = vsub.s32 %v399, %v401
    %v403 = vrot.slane %v395, %v402
    %v405 = vunpack.c.l.s4 1934713408
    %v406 = vunpack.c.0.s8 %v405
    %v407 = vlaneseq
    %v408 = vshrl.u32 %v407, 7
    %v409 = vsub.s32 %v406, %v408
    %v410 = vrot.slane %v396, %v409
    %v411 = vcombine.low %v378, %v394
    %v412 = vcombine.high %v378, %v394
    %v414 = vunpack.c.l.s4 1934713408
    %v415 = vunpack.c.0.s8 %v414
    %v416 = vlaneseq
    %v417 = vshrl.u32 %v416, 7
    %v418 = vsub.s32 %v415, %v417
    %v419 = vrot.slane %v411, %v418
    %v421 = vunpack.c.l.s4 1934713408
    %v422 = vunpack.c.0.s8 %v421
    %v423 = vlaneseq
    %v424 = vshrl.u32 %v423, 7
    %v425 = vsub.s32 %v422, %v424
    %v426 = vrot.slane %v412, %v425
    %v427 = vcombine.high %v403, 0.0
    %v428 = vcombine.high %v410, 0.0
    %v429 = vcombine.high %v419, 0.0
    %v430 = vcombine.high %v426, 0.0
    %v431 = vcombine.low %v208, %v354
    %v432 = vcombine.high %v208, %v354
    %v434 = vunpack.c.l.s4 1983009808
    %v435 = vunpack.c.0.s8 %v434
    %v436 = vlaneseq
    %v437 = vshrl.u32 %v436, 7
    %v438 = vsub.s32 %v435, %v437
    %v439 = vrot.slane %v431, %v438
    %v441 = vunpack.c.l.s4 1983009808
    %v442 = vunpack.c.0.s8 %v441
    %v443 = vlaneseq
    %v444 = vshrl.u32 %v443, 7
    %v445 = vsub.s32 %v442, %v444
    %v446 = vrot.slane %v432, %v445
    %v447 = vcombine.low %v348, %v360
    %v448 = vcombine.high %v348, %v360
    %v450 = vunpack.c.l.s4 1983009808
    %v451 = vunpack.c.0.s8 %v450
    %v452 = vlaneseq
    %v453 = vshrl.u32 %v452, 7
    %v454 = vsub.s32 %v451, %v453
    %v455 = vrot.slane %v447, %v454
    %v457 = vunpack.c.l.s4 1983009808
    %v458 = vunpack.c.0.s8 %v457
    %v459 = vlaneseq
    %v460 = vshrl.u32 %v459, 7
    %v461 = vsub.s32 %v458, %v460
    %v462 = vrot.slane %v448, %v461
    %v463 = vcombine.low %v439, %v455
    %v464 = vcombine.high %v439, %v455
    %v466 = vunpack.c.l.s4 1934713408
    %v467 = vunpack.c.0.s8 %v466
    %v468 = vlaneseq
    %v469 = vshrl.u32 %v468, 7
    %v470 = vsub.s32 %v467, %v469
    %v471 = vrot.slane %v463, %v470
    %v473 = vunpack.c.l.s4 1934713408
    %v474 = vunpack.c.0.s8 %v473
    %v475 = vlaneseq
    %v476 = vshrl.u32 %v475, 7
    %v477 = vsub.s32 %v474, %v476
    %v478 = vrot.slane %v464, %v477
    %v479 = vcombine.low %v446, %v462
    %v480 = vcombine.high %v446, %v462
    %v482 = vunpack.c.l.s4 1934713408
    %v483 = vunpack.c.0.s8 %v482
    %v484 = vlaneseq
    %v485 = vshrl.u32 %v484, 7
    %v486 = vsub.s32 %v483, %v485
    %v487 = vrot.slane %v479, %v486
    %v489 = vunpack.c.l.s4 1934713408
    %v490 = vunpack.c.0.s8 %v489
    %v491 = vlaneseq
    %v492 = vshrl.u32 %v491, 7
    %v493 = vsub.s32 %v490, %v492
    %v494 = vrot.slane %v480, %v493
    %v495 = vcombine.high %v471, 0.0
    %v496 = vcombine.high %v478, 0.0
    %v497 = vcombine.high %v487, 0.0
    %v498 = vcombine.high %v494, 0.0
    %v499 = vcombine.low %v403, %v410
    %v501 = vunpack.c.l.s4 1983009808
    %v502 = vunpack.c.0.s8 %v501
    %v503 = vlaneseq
    %v504 = vshrl.u32 %v503, 7
    %v505 = vsub.s32 %v502, %v504
    %v506 = vrot.slane %v499, %v505
    %v507 = vcombine.low %v427, %v428
    %v509 = vunpack.c.l.s4 1983009808
    %v510 = vunpack.c.0.s8 %v509
    %v511 = vlaneseq
    %v512 = vshrl.u32 %v511, 7
    %v513 = vsub.s32 %v510, %v512
    %v514 = vrot.slane %v507, %v513
    %v515 = vcombine.low %v419, %v426
    %v517 = vunpack.c.l.s4 1983009808
    %v518 = vunpack.c.0.s8 %v517
    %v519 = vlaneseq
    %v520 = vshrl.u32 %v519, 7
    %v521 = vsub.s32 %v518, %v520
    %v522 = vrot.slane %v515, %v521
    %v523 = vcombine.low %v429, %v430
    %v525 = vunpack.c.l.s4 1983009808
    %v526 = vunpack.c.0.s8 %v525
    %v527 = vlaneseq
    %v528 = vshrl.u32 %v527, 7
    %v529 = vsub.s32 %v526, %v528
    %v530 = vrot.slane %v523, %v529
    %v531 = vcombine.low %v506, %v514
    %v532 = vcombine.high %v506, %v514
    %v534 = vunpack.c.l.s4 1934713408
    %v535 = vunpack.c.0.s8 %v534
    %v536 = vlaneseq
    %v537 = vshrl.u32 %v536, 7
    %v538 = vsub.s32 %v535, %v537
    %v539 = vrot.slane %v531, %v538
    %v541 = vunpack.c.l.s4 1934713408
    %v542 = vunpack.c.0.s8 %v541
    %v543 = vlaneseq
    %v544 = vshrl.u32 %v543, 7
    %v545 = vsub.s32 %v542, %v544
    %v546 = vrot.slane %v532, %v545
    %v547 = vcombine.low %v522, %v530
    %v548 = vcombine.high %v522, %v530
    %v550 = vunpack.c.l.s4 1934713408
    %v551 = vunpack.c.0.s8 %v550
    %v552 = vlaneseq
    %v553 = vshrl.u32 %v552, 7
    %v554 = vsub.s32 %v551, %v553
    %v555 = vrot.slane %v547, %v554
    %v557 = vunpack.c.l.s4 1934713408
    %v558 = vunpack.c.0.s8 %v557
    %v559 = vlaneseq
    %v560 = vshrl.u32 %v559, 7
    %v561 = vsub.s32 %v558, %v560
    %v562 = vrot.slane %v548, %v561
    %v563 = vcombine.low %v539, %v555
    %v564 = vcombine.high %v539, %v555
    %v565 = vcombine.low %v546, %v562
    %v566 = vcombine.high %v546, %v562
    %v567 = vcombine.low %v471, %v478
    %v569 = vunpack.c.l.s4 1983009808
    %v570 = vunpack.c.0.s8 %v569
    %v571 = vlaneseq
    %v572 = vshrl.u32 %v571, 7
    %v573 = vsub.s32 %v570, %v572
    %v574 = vrot.slane %v567, %v573
    %v575 = vcombine.low %v495, %v496
    %v577 = vunpack.c.l.s4 1983009808
    %v578 = vunpack.c.0.s8 %v577
    %v579 = vlaneseq
    %v580 = vshrl.u32 %v579, 7
    %v581 = vsub.s32 %v578, %v580
    %v582 = vrot.slane %v575, %v581
    %v583 = vcombine.low %v487, %v494
    %v585 = vunpack.c.l.s4 1983009808
    %v586 = vunpack.c.0.s8 %v585
    %v587 = vlaneseq
    %v588 = vshrl.u32 %v587, 7
    %v589 = vsub.s32 %v586, %v588
    %v590 = vrot.slane %v583, %v589
    %v591 = vcombine.low %v497, %v498
    %v593 = vunpack.c.l.s4 1983009808
    %v594 = vunpack.c.0.s8 %v593
    %v595 = vlaneseq
    %v596 = vshrl.u32 %v595, 7
    %v597 = vsub.s32 %v594, %v596
    %v598 = vrot.slane %v591, %v597
    %v599 = vcombine.low %v574, %v582
    %v600 = vcombine.high %v574, %v582
    %v602 = vunpack.c.l.s4 1934713408
    %v603 = vunpack.c.0.s8 %v602
    %v604 = vlaneseq
    %v605 = vshrl.u32 %v604, 7
    %v606 = vsub.s32 %v603, %v605
    %v607 = vrot.slane %v599, %v606
    %v609 = vunpack.c.l.s4 1934713408
    %v610 = vunpack.c.0.s8 %v609
    %v611 = vlaneseq
    %v612 = vshrl.u32 %v611, 7
    %v613 = vsub.s32 %v610, %v612
    %v614 = vrot.slane %v600, %v613
    %v615 = vcombine.low %v590, %v598
    %v616 = vcombine.high %v590, %v598
    %v618 = vunpack.c.l.s4 1934713408
    %v619 = vunpack.c.0.s8 %v618
    %v620 = vlaneseq
    %v621 = vshrl.u32 %v620, 7
    %v622 = vsub.s32 %v619, %v621
    %v623 = vrot.slane %v615, %v622
    %v625 = vunpack.c.l.s4 1934713408
    %v626 = vunpack.c.0.s8 %v625
    %v627 = vlaneseq
    %v628 = vshrl.u32 %v627, 7
    %v629 = vsub.s32 %v626, %v628
    %v630 = vrot.slane %v616, %v629
    %v631 = vcombine.low %v607, %v623
    %v632 = vcombine.high %v607, %v623
    %v633 = vcombine.low %v614, %v630
    %v634 = vcombine.high %v614, %v630
    %v635 = vpack.c.bf16 %v563, %v563
    %v636 = vpack.c.bf16 %v564, %v564
    %v637 = vpack.c.bf16 %v565, %v565
    %v638 = vpack.c.bf16 %v566, %v566
    %v639 = vpack.c.bf16 %v631, %v631
    %v640 = vpack.c.bf16 %v632, %v632
    %v641 = vpack.c.bf16 %v633, %v633
    %v642 = vpack.c.bf16 %v634, %v634
    %645 = vrot.lane.b32.xlu0 %v271, 120
    %v646 = vpop.permute.xlu0 %645
    %647 = vrot.lane.b32.xlu0 %v274, 120
    %v648 = vpop.permute.xlu0 %647
    %651 = vrot.lane.b32.xlu0 %v271, 112
    %v652 = vpop.permute.xlu0 %651
    %653 = vrot.lane.b32.xlu0 %v274, 112
    %v654 = vpop.permute.xlu0 %653
    %657 = vrot.lane.b32.xlu0 %v271, 104
    %v658 = vpop.permute.xlu0 %657
    %659 = vrot.lane.b32.xlu0 %v274, 104
    %v660 = vpop.permute.xlu0 %659
    %v663 = vcombine.low %v271, %v652
    %v664 = vcombine.high %v271, %v652
    %v666 = vunpack.c.l.s4 1983009808
    %v667 = vunpack.c.0.s8 %v666
    %v668 = vlaneseq
    %v669 = vshrl.u32 %v668, 7
    %v670 = vsub.s32 %v667, %v669
    %v671 = vrot.slane %v663, %v670
    %v673 = vunpack.c.l.s4 1983009808
    %v674 = vunpack.c.0.s8 %v673
    %v675 = vlaneseq
    %v676 = vshrl.u32 %v675, 7
    %v677 = vsub.s32 %v674, %v676
    %v678 = vrot.slane %v664, %v677
    %v679 = vcombine.low %v646, %v658
    %v680 = vcombine.high %v646, %v658
    %v682 = vunpack.c.l.s4 1983009808
    %v683 = vunpack.c.0.s8 %v682
    %v684 = vlaneseq
    %v685 = vshrl.u32 %v684, 7
    %v686 = vsub.s32 %v683, %v685
    %v687 = vrot.slane %v679, %v686
    %v689 = vunpack.c.l.s4 1983009808
    %v690 = vunpack.c.0.s8 %v689
    %v691 = vlaneseq
    %v692 = vshrl.u32 %v691, 7
    %v693 = vsub.s32 %v690, %v692
    %v694 = vrot.slane %v680, %v693
    %v695 = vcombine.low %v671, %v687
    %v696 = vcombine.high %v671, %v687
    %v698 = vunpack.c.l.s4 1934713408
    %v699 = vunpack.c.0.s8 %v698
    %v700 = vlaneseq
    %v701 = vshrl.u32 %v700, 7
    %v702 = vsub.s32 %v699, %v701
    %v703 = vrot.slane %v695, %v702
    %v705 = vunpack.c.l.s4 1934713408
    %v706 = vunpack.c.0.s8 %v705
    %v707 = vlaneseq
    %v708 = vshrl.u32 %v707, 7
    %v709 = vsub.s32 %v706, %v708
    %v710 = vrot.slane %v696, %v709
    %v711 = vcombine.low %v678, %v694
    %v712 = vcombine.high %v678, %v694
    %v714 = vunpack.c.l.s4 1934713408
    %v715 = vunpack.c.0.s8 %v714
    %v716 = vlaneseq
    %v717 = vshrl.u32 %v716, 7
    %v718 = vsub.s32 %v715, %v717
    %v719 = vrot.slane %v711, %v718
    %v721 = vunpack.c.l.s4 1934713408
    %v722 = vunpack.c.0.s8 %v721
    %v723 = vlaneseq
    %v724 = vshrl.u32 %v723, 7
    %v725 = vsub.s32 %v722, %v724
    %v726 = vrot.slane %v712, %v725
    %v727 = vcombine.high %v703, 0.0
    %v728 = vcombine.high %v710, 0.0
    %v729 = vcombine.high %v719, 0.0
    %v730 = vcombine.high %v726, 0.0
    %v731 = vcombine.low %v274, %v654
    %v732 = vcombine.high %v274, %v654
    %v734 = vunpack.c.l.s4 1983009808
    %v735 = vunpack.c.0.s8 %v734
    %v736 = vlaneseq
    %v737 = vshrl.u32 %v736, 7
    %v738 = vsub.s32 %v735, %v737
    %v739 = vrot.slane %v731, %v738
    %v741 = vunpack.c.l.s4 1983009808
    %v742 = vunpack.c.0.s8 %v741
    %v743 = vlaneseq
    %v744 = vshrl.u32 %v743, 7
    %v745 = vsub.s32 %v742, %v744
    %v746 = vrot.slane %v732, %v745
    %v747 = vcombine.low %v648, %v660
    %v748 = vcombine.high %v648, %v660
    %v750 = vunpack.c.l.s4 1983009808
    %v751 = vunpack.c.0.s8 %v750
    %v752 = vlaneseq
    %v753 = vshrl.u32 %v752, 7
    %v754 = vsub.s32 %v751, %v753
    %v755 = vrot.slane %v747, %v754
    %v757 = vunpack.c.l.s4 1983009808
    %v758 = vunpack.c.0.s8 %v757
    %v759 = vlaneseq
    %v760 = vshrl.u32 %v759, 7
    %v761 = vsub.s32 %v758, %v760
    %v762 = vrot.slane %v748, %v761
    %v763 = vcombine.low %v739, %v755
    %v764 = vcombine.high %v739, %v755
    %v766 = vunpack.c.l.s4 1934713408
    %v767 = vunpack.c.0.s8 %v766
    %v768 = vlaneseq
    %v769 = vshrl.u32 %v768, 7
    %v770 = vsub.s32 %v767, %v769
    %v771 = vrot.slane %v763, %v770
    %v773 = vunpack.c.l.s4 1934713408
    %v774 = vunpack.c.0.s8 %v773
    %v775 = vlaneseq
    %v776 = vshrl.u32 %v775, 7
    %v777 = vsub.s32 %v774, %v776
    %v778 = vrot.slane %v764, %v777
    %v779 = vcombine.low %v746, %v762
    %v780 = vcombine.high %v746, %v762
    %v782 = vunpack.c.l.s4 1934713408
    %v783 = vunpack.c.0.s8 %v782
    %v784 = vlaneseq
    %v785 = vshrl.u32 %v784, 7
    %v786 = vsub.s32 %v783, %v785
    %v787 = vrot.slane %v779, %v786
    %v789 = vunpack.c.l.s4 1934713408
    %v790 = vunpack.c.0.s8 %v789
    %v791 = vlaneseq
    %v792 = vshrl.u32 %v791, 7
    %v793 = vsub.s32 %v790, %v792
    %v794 = vrot.slane %v780, %v793
    %v795 = vcombine.high %v771, 0.0
    %v796 = vcombine.high %v778, 0.0
    %v797 = vcombine.high %v787, 0.0
    %v798 = vcombine.high %v794, 0.0
    %v799 = vcombine.low %v703, %v710
    %v801 = vunpack.c.l.s4 1983009808
    %v802 = vunpack.c.0.s8 %v801
    %v803 = vlaneseq
    %v804 = vshrl.u32 %v803, 7
    %v805 = vsub.s32 %v802, %v804
    %v806 = vrot.slane %v799, %v805
    %v807 = vcombine.low %v727, %v728
    %v809 = vunpack.c.l.s4 1983009808
    %v810 = vunpack.c.0.s8 %v809
    %v811 = vlaneseq
    %v812 = vshrl.u32 %v811, 7
    %v813 = vsub.s32 %v810, %v812
    %v814 = vrot.slane %v807, %v813
    %v815 = vcombine.low %v719, %v726
    %v817 = vunpack.c.l.s4 1983009808
    %v818 = vunpack.c.0.s8 %v817
    %v819 = vlaneseq
    %v820 = vshrl.u32 %v819, 7
    %v821 = vsub.s32 %v818, %v820
    %v822 = vrot.slane %v815, %v821
    %v823 = vcombine.low %v729, %v730
    %v825 = vunpack.c.l.s4 1983009808
    %v826 = vunpack.c.0.s8 %v825
    %v827 = vlaneseq
    %v828 = vshrl.u32 %v827, 7
    %v829 = vsub.s32 %v826, %v828
    %v830 = vrot.slane %v823, %v829
    %v831 = vcombine.low %v806, %v814
    %v832 = vcombine.high %v806, %v814
    %v834 = vunpack.c.l.s4 1934713408
    %v835 = vunpack.c.0.s8 %v834
    %v836 = vlaneseq
    %v837 = vshrl.u32 %v836, 7
    %v838 = vsub.s32 %v835, %v837
    %v839 = vrot.slane %v831, %v838
    %v841 = vunpack.c.l.s4 1934713408
    %v842 = vunpack.c.0.s8 %v841
    %v843 = vlaneseq
    %v844 = vshrl.u32 %v843, 7
    %v845 = vsub.s32 %v842, %v844
    %v846 = vrot.slane %v832, %v845
    %v847 = vcombine.low %v822, %v830
    %v848 = vcombine.high %v822, %v830
    %v850 = vunpack.c.l.s4 1934713408
    %v851 = vunpack.c.0.s8 %v850
    %v852 = vlaneseq
    %v853 = vshrl.u32 %v852, 7
    %v854 = vsub.s32 %v851, %v853
    %v855 = vrot.slane %v847, %v854
    %v857 = vunpack.c.l.s4 1934713408
    %v858 = vunpack.c.0.s8 %v857
    %v859 = vlaneseq
    %v860 = vshrl.u32 %v859, 7
    %v861 = vsub.s32 %v858, %v860
    %v862 = vrot.slane %v848, %v861
    %v863 = vcombine.low %v839, %v855
    %v864 = vcombine.high %v839, %v855
    %v865 = vcombine.low %v846, %v862
    %v866 = vcombine.high %v846, %v862
    %v867 = vcombine.low %v771, %v778
    %v869 = vunpack.c.l.s4 1983009808
    %v870 = vunpack.c.0.s8 %v869
    %v871 = vlaneseq
    %v872 = vshrl.u32 %v871, 7
    %v873 = vsub.s32 %v870, %v872
    %v874 = vrot.slane %v867, %v873
    %v875 = vcombine.low %v795, %v796
    %v877 = vunpack.c.l.s4 1983009808
    %v878 = vunpack.c.0.s8 %v877
    %v879 = vlaneseq
    %v880 = vshrl.u32 %v879, 7
    %v881 = vsub.s32 %v878, %v880
    %v882 = vrot.slane %v875, %v881
    %v883 = vcombine.low %v787, %v794
    %v885 = vunpack.c.l.s4 1983009808
    %v886 = vunpack.c.0.s8 %v885
    %v887 = vlaneseq
    %v888 = vshrl.u32 %v887, 7
    %v889 = vsub.s32 %v886, %v888
    %v890 = vrot.slane %v883, %v889
    %v891 = vcombine.low %v797, %v798
    %v893 = vunpack.c.l.s4 1983009808
    %v894 = vunpack.c.0.s8 %v893
    %v895 = vlaneseq
    %v896 = vshrl.u32 %v895, 7
    %v897 = vsub.s32 %v894, %v896
    %v898 = vrot.slane %v891, %v897
    %v899 = vcombine.low %v874, %v882
    %v900 = vcombine.high %v874, %v882
    %v902 = vunpack.c.l.s4 1934713408
    %v903 = vunpack.c.0.s8 %v902
    %v904 = vlaneseq
    %v905 = vshrl.u32 %v904, 7
    %v906 = vsub.s32 %v903, %v905
    %v907 = vrot.slane %v899, %v906
    %v909 = vunpack.c.l.s4 1934713408
    %v910 = vunpack.c.0.s8 %v909
    %v911 = vlaneseq
    %v912 = vshrl.u32 %v911, 7
    %v913 = vsub.s32 %v910, %v912
    %v914 = vrot.slane %v900, %v913
    %v915 = vcombine.low %v890, %v898
    %v916 = vcombine.high %v890, %v898
    %v918 = vunpack.c.l.s4 1934713408
    %v919 = vunpack.c.0.s8 %v918
    %v920 = vlaneseq
    %v921 = vshrl.u32 %v920, 7
    %v922 = vsub.s32 %v919, %v921
    %v923 = vrot.slane %v915, %v922
    %v925 = vunpack.c.l.s4 1934713408
    %v926 = vunpack.c.0.s8 %v925
    %v927 = vlaneseq
    %v928 = vshrl.u32 %v927, 7
    %v929 = vsub.s32 %v926, %v928
    %v930 = vrot.slane %v916, %v929
    %v931 = vcombine.low %v907, %v923
    %v932 = vcombine.high %v907, %v923
    %v933 = vcombine.low %v914, %v930
    %v934 = vcombine.high %v914, %v930
    %v935 = vpack.c.bf16 %v863, %v863
    %v936 = vpack.c.bf16 %v864, %v864
    %v937 = vpack.c.bf16 %v865, %v865
    %v938 = vpack.c.bf16 %v866, %v866
    %v939 = vpack.c.bf16 %v931, %v931
    %v940 = vpack.c.bf16 %v932, %v932
    %v941 = vpack.c.bf16 %v933, %v933
    %v942 = vpack.c.bf16 %v934, %v934
    %945 = vrot.lane.b32.xlu0 %v337, 120
    %v946 = vpop.permute.xlu0 %945
    %947 = vrot.lane.b32.xlu0 %v340, 120
    %v948 = vpop.permute.xlu0 %947
    %951 = vrot.lane.b32.xlu0 %v337, 112
    %v952 = vpop.permute.xlu0 %951
    %953 = vrot.lane.b32.xlu0 %v340, 112
    %v954 = vpop.permute.xlu0 %953
    %957 = vrot.lane.b32.xlu0 %v337, 104
    %v958 = vpop.permute.xlu0 %957
    %959 = vrot.lane.b32.xlu0 %v340, 104
    %v960 = vpop.permute.xlu0 %959
    %v963 = vcombine.low %v337, %v952
    %v964 = vcombine.high %v337, %v952
    %v966 = vunpack.c.l.s4 1983009808
    %v967 = vunpack.c.0.s8 %v966
    %v968 = vlaneseq
    %v969 = vshrl.u32 %v968, 7
    %v970 = vsub.s32 %v967, %v969
    %v971 = vrot.slane %v963, %v970
    %v973 = vunpack.c.l.s4 1983009808
    %v974 = vunpack.c.0.s8 %v973
    %v975 = vlaneseq
    %v976 = vshrl.u32 %v975, 7
    %v977 = vsub.s32 %v974, %v976
    %v978 = vrot.slane %v964, %v977
    %v979 = vcombine.low %v946, %v958
    %v980 = vcombine.high %v946, %v958
    %v982 = vunpack.c.l.s4 1983009808
    %v983 = vunpack.c.0.s8 %v982
    %v984 = vlaneseq
    %v985 = vshrl.u32 %v984, 7
    %v986 = vsub.s32 %v983, %v985
    %v987 = vrot.slane %v979, %v986
    %v989 = vunpack.c.l.s4 1983009808
    %v990 = vunpack.c.0.s8 %v989
    %v991 = vlaneseq
    %v992 = vshrl.u32 %v991, 7
    %v993 = vsub.s32 %v990, %v992
    %v994 = vrot.slane %v980, %v993
    %v995 = vcombine.low %v971, %v987
    %v996 = vcombine.high %v971, %v987
    %v998 = vunpack.c.l.s4 1934713408
    %v999 = vunpack.c.0.s8 %v998
    %v1000 = vlaneseq
    %v1001 = vshrl.u32 %v1000, 7
    %v1002 = vsub.s32 %v999, %v1001
    %v1003 = vrot.slane %v995, %v1002
    %v1005 = vunpack.c.l.s4 1934713408
    %v1006 = vunpack.c.0.s8 %v1005
    %v1007 = vlaneseq
    %v1008 = vshrl.u32 %v1007, 7
    %v1009 = vsub.s32 %v1006, %v1008
    %v1010 = vrot.slane %v996, %v1009
    %v1011 = vcombine.low %v978, %v994
    %v1012 = vcombine.high %v978, %v994
    %v1014 = vunpack.c.l.s4 1934713408
    %v1015 = vunpack.c.0.s8 %v1014
    %v1016 = vlaneseq
    %v1017 = vshrl.u32 %v1016, 7
    %v1018 = vsub.s32 %v1015, %v1017
    %v1019 = vrot.slane %v1011, %v1018
    %v1021 = vunpack.c.l.s4 1934713408
    %v1022 = vunpack.c.0.s8 %v1021
    %v1023 = vlaneseq
    %v1024 = vshrl.u32 %v1023, 7
    %v1025 = vsub.s32 %v1022, %v1024
    %v1026 = vrot.slane %v1012, %v1025
    %v1027 = vcombine.high %v1003, 0.0
    %v1028 = vcombine.high %v1010, 0.0
    %v1029 = vcombine.high %v1019, 0.0
    %v1030 = vcombine.high %v1026, 0.0
    %v1031 = vcombine.low %v340, %v954
    %v1032 = vcombine.high %v340, %v954
    %v1034 = vunpack.c.l.s4 1983009808
    %v1035 = vunpack.c.0.s8 %v1034
    %v1036 = vlaneseq
    %v1037 = vshrl.u32 %v1036, 7
    %v1038 = vsub.s32 %v1035, %v1037
    %v1039 = vrot.slane %v1031, %v1038
    %v1041 = vunpack.c.l.s4 1983009808
    %v1042 = vunpack.c.0.s8 %v1041
    %v1043 = vlaneseq
    %v1044 = vshrl.u32 %v1043, 7
    %v1045 = vsub.s32 %v1042, %v1044
    %v1046 = vrot.slane %v1032, %v1045
    %v1047 = vcombine.low %v948, %v960
    %v1048 = vcombine.high %v948, %v960
    %v1050 = vunpack.c.l.s4 1983009808
    %v1051 = vunpack.c.0.s8 %v1050
    %v1052 = vlaneseq
    %v1053 = vshrl.u32 %v1052, 7
    %v1054 = vsub.s32 %v1051, %v1053
    %v1055 = vrot.slane %v1047, %v1054
    %v1057 = vunpack.c.l.s4 1983009808
    %v1058 = vunpack.c.0.s8 %v1057
    %v1059 = vlaneseq
    %v1060 = vshrl.u32 %v1059, 7
    %v1061 = vsub.s32 %v1058, %v1060
    %v1062 = vrot.slane %v1048, %v1061
    %v1063 = vcombine.low %v1039, %v1055
    %v1064 = vcombine.high %v1039, %v1055
    %v1066 = vunpack.c.l.s4 1934713408
    %v1067 = vunpack.c.0.s8 %v1066
    %v1068 = vlaneseq
    %v1069 = vshrl.u32 %v1068, 7
    %v1070 = vsub.s32 %v1067, %v1069
    %v1071 = vrot.slane %v1063, %v1070
    %v1073 = vunpack.c.l.s4 1934713408
    %v1074 = vunpack.c.0.s8 %v1073
    %v1075 = vlaneseq
    %v1076 = vshrl.u32 %v1075, 7
    %v1077 = vsub.s32 %v1074, %v1076
    %v1078 = vrot.slane %v1064, %v1077
    %v1079 = vcombine.low %v1046, %v1062
    %v1080 = vcombine.high %v1046, %v1062
    %v1082 = vunpack.c.l.s4 1934713408
    %v1083 = vunpack.c.0.s8 %v1082
    %v1084 = vlaneseq
    %v1085 = vshrl.u32 %v1084, 7
    %v1086 = vsub.s32 %v1083, %v1085
    %v1087 = vrot.slane %v1079, %v1086
    %v1089 = vunpack.c.l.s4 1934713408
    %v1090 = vunpack.c.0.s8 %v1089
    %v1091 = vlaneseq
    %v1092 = vshrl.u32 %v1091, 7
    %v1093 = vsub.s32 %v1090, %v1092
    %v1094 = vrot.slane %v1080, %v1093
    %v1095 = vcombine.high %v1071, 0.0
    %v1096 = vcombine.high %v1078, 0.0
    %v1097 = vcombine.high %v1087, 0.0
    %v1098 = vcombine.high %v1094, 0.0
    %v1099 = vcombine.low %v1003, %v1010
    %v1101 = vunpack.c.l.s4 1983009808
    %v1102 = vunpack.c.0.s8 %v1101
    %v1103 = vlaneseq
    %v1104 = vshrl.u32 %v1103, 7
    %v1105 = vsub.s32 %v1102, %v1104
    %v1106 = vrot.slane %v1099, %v1105
    %v1107 = vcombine.low %v1027, %v1028
    %v1109 = vunpack.c.l.s4 1983009808
    %v1110 = vunpack.c.0.s8 %v1109
    %v1111 = vlaneseq
    %v1112 = vshrl.u32 %v1111, 7
    %v1113 = vsub.s32 %v1110, %v1112
    %v1114 = vrot.slane %v1107, %v1113
    %v1115 = vcombine.low %v1019, %v1026
    %v1117 = vunpack.c.l.s4 1983009808
    %v1118 = vunpack.c.0.s8 %v1117
    %v1119 = vlaneseq
    %v1120 = vshrl.u32 %v1119, 7
    %v1121 = vsub.s32 %v1118, %v1120
    %v1122 = vrot.slane %v1115, %v1121
    %v1123 = vcombine.low %v1029, %v1030
    %v1125 = vunpack.c.l.s4 1983009808
    %v1126 = vunpack.c.0.s8 %v1125
    %v1127 = vlaneseq
    %v1128 = vshrl.u32 %v1127, 7
    %v1129 = vsub.s32 %v1126, %v1128
    %v1130 = vrot.slane %v1123, %v1129
    %v1131 = vcombine.low %v1106, %v1114
    %v1132 = vcombine.high %v1106, %v1114
    %v1134 = vunpack.c.l.s4 1934713408
    %v1135 = vunpack.c.0.s8 %v1134
    %v1136 = vlaneseq
    %v1137 = vshrl.u32 %v1136, 7
    %v1138 = vsub.s32 %v1135, %v1137
    %v1139 = vrot.slane %v1131, %v1138
    %v1141 = vunpack.c.l.s4 1934713408
    %v1142 = vunpack.c.0.s8 %v1141
    %v1143 = vlaneseq
    %v1144 = vshrl.u32 %v1143, 7
    %v1145 = vsub.s32 %v1142, %v1144
    %v1146 = vrot.slane %v1132, %v1145
    %v1147 = vcombine.low %v1122, %v1130
    %v1148 = vcombine.high %v1122, %v1130
    %v1150 = vunpack.c.l.s4 1934713408
    %v1151 = vunpack.c.0.s8 %v1150
    %v1152 = vlaneseq
    %v1153 = vshrl.u32 %v1152, 7
    %v1154 = vsub.s32 %v1151, %v1153
    %v1155 = vrot.slane %v1147, %v1154
    %v1157 = vunpack.c.l.s4 1934713408
    %v1158 = vunpack.c.0.s8 %v1157
    %v1159 = vlaneseq
    %v1160 = vshrl.u32 %v1159, 7
    %v1161 = vsub.s32 %v1158, %v1160
    %v1162 = vrot.slane %v1148, %v1161
    %v1163 = vcombine.low %v1139, %v1155
    %v1164 = vcombine.high %v1139, %v1155
    %v1165 = vcombine.low %v1146, %v1162
    %v1166 = vcombine.high %v1146, %v1162
    %v1167 = vcombine.low %v1071, %v1078
    %v1169 = vunpack.c.l.s4 1983009808
    %v1170 = vunpack.c.0.s8 %v1169
    %v1171 = vlaneseq
    %v1172 = vshrl.u32 %v1171, 7
    %v1173 = vsub.s32 %v1170, %v1172
    %v1174 = vrot.slane %v1167, %v1173
    %v1175 = vcombine.low %v1095, %v1096
    %v1177 = vunpack.c.l.s4 1983009808
    %v1178 = vunpack.c.0.s8 %v1177
    %v1179 = vlaneseq
    %v1180 = vshrl.u32 %v1179, 7
    %v1181 = vsub.s32 %v1178, %v1180
    %v1182 = vrot.slane %v1175, %v1181
    %v1183 = vcombine.low %v1087, %v1094
    %v1185 = vunpack.c.l.s4 1983009808
    %v1186 = vunpack.c.0.s8 %v1185
    %v1187 = vlaneseq
    %v1188 = vshrl.u32 %v1187, 7
    %v1189 = vsub.s32 %v1186, %v1188
    %v1190 = vrot.slane %v1183, %v1189
    %v1191 = vcombine.low %v1097, %v1098
    %v1193 = vunpack.c.l.s4 1983009808
    %v1194 = vunpack.c.0.s8 %v1193
    %v1195 = vlaneseq
    %v1196 = vshrl.u32 %v1195, 7
    %v1197 = vsub.s32 %v1194, %v1196
    %v1198 = vrot.slane %v1191, %v1197
    %v1199 = vcombine.low %v1174, %v1182
    %v1200 = vcombine.high %v1174, %v1182
    %v1202 = vunpack.c.l.s4 1934713408
    %v1203 = vunpack.c.0.s8 %v1202
    %v1204 = vlaneseq
    %v1205 = vshrl.u32 %v1204, 7
    %v1206 = vsub.s32 %v1203, %v1205
    %v1207 = vrot.slane %v1199, %v1206
    %v1209 = vunpack.c.l.s4 1934713408
    %v1210 = vunpack.c.0.s8 %v1209
    %v1211 = vlaneseq
    %v1212 = vshrl.u32 %v1211, 7
    %v1213 = vsub.s32 %v1210, %v1212
    %v1214 = vrot.slane %v1200, %v1213
    %v1215 = vcombine.low %v1190, %v1198
    %v1216 = vcombine.high %v1190, %v1198
    %v1218 = vunpack.c.l.s4 1934713408
    %v1219 = vunpack.c.0.s8 %v1218
    %v1220 = vlaneseq
    %v1221 = vshrl.u32 %v1220, 7
    %v1222 = vsub.s32 %v1219, %v1221
    %v1223 = vrot.slane %v1215, %v1222
    %v1225 = vunpack.c.l.s4 1934713408
    %v1226 = vunpack.c.0.s8 %v1225
    %v1227 = vlaneseq
    %v1228 = vshrl.u32 %v1227, 7
    %v1229 = vsub.s32 %v1226, %v1228
    %v1230 = vrot.slane %v1216, %v1229
    %v1231 = vcombine.low %v1207, %v1223
    %v1232 = vcombine.high %v1207, %v1223
    %v1233 = vcombine.low %v1214, %v1230
    %v1234 = vcombine.high %v1214, %v1230
    %v1235 = vpack.c.bf16 %v1163, %v1163
    %v1236 = vpack.c.bf16 %v1164, %v1164
    %v1237 = vpack.c.bf16 %v1165, %v1165
    %v1238 = vpack.c.bf16 %v1166, %v1166
    %v1239 = vpack.c.bf16 %v1231, %v1231
    %v1240 = vpack.c.bf16 %v1232, %v1232
    %v1241 = vpack.c.bf16 %v1233, %v1233
    %v1242 = vpack.c.bf16 %v1234, %v1234
    %vm1243 = vcmask 64512
    %v1245 = vsel %vm1243, %v635, 0
    %v1248 = vsel %vm1243, %v935, 0
    %1250 = vmatprep.subr.bf16.mxu0 0
    %1251 = vmatpush1.bf16.xpose.msra.mxu0 %v1248
    %1252 = vmatprep.subr.bf16.mxu0 0
    %1253 = vmatpush1.bf16.xpose.msra.mxu0 0
    %1254 = vmatprep.subr.bf16.mxu0 0
    %1255 = vmatpush1.bf16.xpose.msra.mxu0 0
    %1256 = vmatprep.subr.bf16.mxu0 0
    %1257 = vmatpush1.bf16.xpose.msra.mxu0 0
    %1258 = vmatprep.subr.bf16.mxu0 0
    %1259 = vmatpush1.bf16.xpose.msra.mxu0 0
    %1260 = vmatprep.subr.bf16.mxu0 0
    %1261 = vmatpush1.bf16.xpose.msra.mxu0 0
    %1262 = vmatprep.subr.bf16.mxu0 0
    %1263 = vmatpush1.bf16.xpose.msra.mxu0 0
    %1264 = vmatprep.subr.bf16.mxu0 0
    %1265 = vmatpush1.bf16.xpose.msra.mxu0 0
    %1266 = vmatprep.subr.bf16.mxu0 0
    %1267 = vmatpush1.bf16.xpose.msra.mxu0 0
    %1268 = vmatprep.subr.bf16.mxu0 0
    %1269 = vmatpush1.bf16.xpose.msra.mxu0 0
    %1270 = vmatprep.subr.bf16.mxu0 0
    %1271 = vmatpush1.bf16.xpose.msra.mxu0 0
    %1272 = vmatprep.subr.bf16.mxu0 0
    %1273 = vmatpush1.bf16.xpose.msra.mxu0 0
    %1274 = vmatprep.subr.bf16.mxu0 0
    %1275 = vmatpush1.bf16.xpose.msra.mxu0 0
    %1276 = vmatprep.subr.bf16.mxu0 0
    %1277 = vmatpush1.bf16.xpose.msra.mxu0 0
    %1278 = vmatprep.subr.bf16.mxu0 0
    %1279 = vmatpush1.bf16.xpose.msra.mxu0 0
    %1280 = vmatprep.subr.bf16.mxu0 0
    %1281 = vmatpush1.bf16.xpose.msra.mxu0 0
    %1282 = vmatprep.mubr.bf16.mxu0 0
    %1283 = vmatmul.mubr.bf16.gmra.mrb[0].mxu0 %v1245
    %v1284 = vpop.f32.mrb[0].mxu0
    %v1285 = vadd.f32 0.0, %v1284
    %v1286 = vpop.f32.mrb[0].mxu0
    %v1287 = vpop.f32.mrb[0].mxu0
    %v1288 = vpop.f32.mrb[0].mxu0
    %1289 = vdwg.mxu0
    %v1291 = vsel %vm1243, %v636, 0
    %v1294 = vsel %vm1243, %v936, 0
    %1296 = vmatprep.subr.bf16.mxu0 0
    %1297 = vmatpush1.bf16.xpose.msra.mxu0 %v1294
    %1298 = vmatprep.subr.bf16.mxu0 0
    %1299 = vmatpush1.bf16.xpose.msra.mxu0 0
    %1300 = vmatprep.subr.bf16.mxu0 0
    %1301 = vmatpush1.bf16.xpose.msra.mxu0 0
    %1302 = vmatprep.subr.bf16.mxu0 0
    %1303 = vmatpush1.bf16.xpose.msra.mxu0 0
    %1304 = vmatprep.subr.bf16.mxu0 0
    %1305 = vmatpush1.bf16.xpose.msra.mxu0 0
    %1306 = vmatprep.subr.bf16.mxu0 0
    %1307 = vmatpush1.bf16.xpose.msra.mxu0 0
    %1308 = vmatprep.subr.bf16.mxu0 0
    %1309 = vmatpush1.bf16.xpose.msra.mxu0 0
    %1310 = vmatprep.subr.bf16.mxu0 0
    %1311 = vmatpush1.bf16.xpose.msra.mxu0 0
    %1312 = vmatprep.subr.bf16.mxu0 0
    %1313 = vmatpush1.bf16.xpose.msra.mxu0 0
    %1314 = vmatprep.subr.bf16.mxu0 0
    %1315 = vmatpush1.bf16.xpose.msra.mxu0 0
    %1316 = vmatprep.subr.bf16.mxu0 0
    %1317 = vmatpush1.bf16.xpose.msra.mxu0 0
    %1318 = vmatprep.subr.bf16.mxu0 0
    %1319 = vmatpush1.bf16.xpose.msra.mxu0 0
    %1320 = vmatprep.subr.bf16.mxu0 0
    %1321 = vmatpush1.bf16.xpose.msra.mxu0 0
    %1322 = vmatprep.subr.bf16.mxu0 0
    %1323 = vmatpush1.bf16.xpose.msra.mxu0 0
    %1324 = vmatprep.subr.bf16.mxu0 0
    %1325 = vmatpush1.bf16.xpose.msra.mxu0 0
    %1326 = vmatprep.subr.bf16.mxu0 0
    %1327 = vmatpush1.bf16.xpose.msra.mxu0 0
    %1328 = vmatprep.mubr.bf16.mxu0 0
    %1329 = vmatmul.mubr.bf16.gmra.mrb[0].mxu0 %v1291
    %v1330 = vpop.f32.mrb[0].mxu0
    %v1331 = vadd.f32 0.0, %v1330
    %v1332 = vpop.f32.mrb[0].mxu0
    %v1333 = vpop.f32.mrb[0].mxu0
    %v1334 = vpop.f32.mrb[0].mxu0
    %1335 = vdwg.mxu0
    %v1337 = vsel %vm1243, %v637, 0
    %v1340 = vsel %vm1243, %v937, 0
    %1342 = vmatprep.subr.bf16.mxu0 0
    %1343 = vmatpush1.bf16.xpose.msra.mxu0 %v1340
    %1344 = vmatprep.subr.bf16.mxu0 0
    %1345 = vmatpush1.bf16.xpose.msra.mxu0 0
    %1346 = vmatprep.subr.bf16.mxu0 0
    %1347 = vmatpush1.bf16.xpose.msra.mxu0 0
    %1348 = vmatprep.subr.bf16.mxu0 0
    %1349 = vmatpush1.bf16.xpose.msra.mxu0 0
    %1350 = vmatprep.subr.bf16.mxu0 0
    %1351 = vmatpush1.bf16.xpose.msra.mxu0 0
    %1352 = vmatprep.subr.bf16.mxu0 0
    %1353 = vmatpush1.bf16.xpose.msra.mxu0 0
    %1354 = vmatprep.subr.bf16.mxu0 0
    %1355 = vmatpush1.bf16.xpose.msra.mxu0 0
    %1356 = vmatprep.subr.bf16.mxu0 0
    %1357 = vmatpush1.bf16.xpose.msra.mxu0 0
    %1358 = vmatprep.subr.bf16.mxu0 0
    %1359 = vmatpush1.bf16.xpose.msra.mxu0 0
    %1360 = vmatprep.subr.bf16.mxu0 0
    %1361 = vmatpush1.bf16.xpose.msra.mxu0 0
    %1362 = vmatprep.subr.bf16.mxu0 0
    %1363 = vmatpush1.bf16.xpose.msra.mxu0 0
    %1364 = vmatprep.subr.bf16.mxu0 0
    %1365 = vmatpush1.bf16.xpose.msra.mxu0 0
    %1366 = vmatprep.subr.bf16.mxu0 0
    %1367 = vmatpush1.bf16.xpose.msra.mxu0 0
    %1368 = vmatprep.subr.bf16.mxu0 0
    %1369 = vmatpush1.bf16.xpose.msra.mxu0 0
    %1370 = vmatprep.subr.bf16.mxu0 0
    %1371 = vmatpush1.bf16.xpose.msra.mxu0 0
    %1372 = vmatprep.subr.bf16.mxu0 0
    %1373 = vmatpush1.bf16.xpose.msra.mxu0 0
    %1374 = vmatprep.mubr.bf16.mxu0 0
    %1375 = vmatmul.mubr.bf16.gmra.mrb[0].mxu0 %v1337
    %v1376 = vpop.f32.mrb[0].mxu0
    %v1377 = vadd.f32 0.0, %v1376
    %v1378 = vpop.f32.mrb[0].mxu0
    %v1379 = vpop.f32.mrb[0].mxu0
    %v1380 = vpop.f32.mrb[0].mxu0
    %1381 = vdwg.mxu0
    %v1383 = vsel %vm1243, %v638, 0
    %v1386 = vsel %vm1243, %v938, 0
    %1388 = vmatprep.subr.bf16.mxu0 0
    %1389 = vmatpush1.bf16.xpose.msra.mxu0 %v1386
    %1390 = vmatprep.subr.bf16.mxu0 0
    %1391 = vmatpush1.bf16.xpose.msra.mxu0 0
    %1392 = vmatprep.subr.bf16.mxu0 0
    %1393 = vmatpush1.bf16.xpose.msra.mxu0 0
    %1394 = vmatprep.subr.bf16.mxu0 0
    %1395 = vmatpush1.bf16.xpose.msra.mxu0 0
    %1396 = vmatprep.subr.bf16.mxu0 0
    %1397 = vmatpush1.bf16.xpose.msra.mxu0 0
    %1398 = vmatprep.subr.bf16.mxu0 0
    %1399 = vmatpush1.bf16.xpose.msra.mxu0 0
    %1400 = vmatprep.subr.bf16.mxu0 0
    %1401 = vmatpush1.bf16.xpose.msra.mxu0 0
    %1402 = vmatprep.subr.bf16.mxu0 0
    %1403 = vmatpush1.bf16.xpose.msra.mxu0 0
    %1404 = vmatprep.subr.bf16.mxu0 0
    %1405 = vmatpush1.bf16.xpose.msra.mxu0 0
    %1406 = vmatprep.subr.bf16.mxu0 0
    %1407 = vmatpush1.bf16.xpose.msra.mxu0 0
    %1408 = vmatprep.subr.bf16.mxu0 0
    %1409 = vmatpush1.bf16.xpose.msra.mxu0 0
    %1410 = vmatprep.subr.bf16.mxu0 0
    %1411 = vmatpush1.bf16.xpose.msra.mxu0 0
    %1412 = vmatprep.subr.bf16.mxu0 0
    %1413 = vmatpush1.bf16.xpose.msra.mxu0 0
    %1414 = vmatprep.subr.bf16.mxu0 0
    %1415 = vmatpush1.bf16.xpose.msra.mxu0 0
    %1416 = vmatprep.subr.bf16.mxu0 0
    %1417 = vmatpush1.bf16.xpose.msra.mxu0 0
    %1418 = vmatprep.subr.bf16.mxu0 0
    %1419 = vmatpush1.bf16.xpose.msra.mxu0 0
    %1420 = vmatprep.mubr.bf16.mxu0 0
    %1421 = vmatmul.mubr.bf16.gmra.mrb[0].mxu0 %v1383
    %v1422 = vpop.f32.mrb[0].mxu0
    %v1423 = vadd.f32 0.0, %v1422
    %v1424 = vpop.f32.mrb[0].mxu0
    %v1425 = vpop.f32.mrb[0].mxu0
    %v1426 = vpop.f32.mrb[0].mxu0
    %1427 = vdwg.mxu0
    %v1429 = vsel %vm1243, %v639, 0
    %v1432 = vsel %vm1243, %v939, 0
    %1434 = vmatprep.subr.bf16.mxu0 0
    %1435 = vmatpush1.bf16.xpose.msra.mxu0 %v1432
    %1436 = vmatprep.subr.bf16.mxu0 0
    %1437 = vmatpush1.bf16.xpose.msra.mxu0 0
    %1438 = vmatprep.subr.bf16.mxu0 0
    %1439 = vmatpush1.bf16.xpose.msra.mxu0 0
    %1440 = vmatprep.subr.bf16.mxu0 0
    %1441 = vmatpush1.bf16.xpose.msra.mxu0 0
    %1442 = vmatprep.subr.bf16.mxu0 0
    %1443 = vmatpush1.bf16.xpose.msra.mxu0 0
    %1444 = vmatprep.subr.bf16.mxu0 0
    %1445 = vmatpush1.bf16.xpose.msra.mxu0 0
    %1446 = vmatprep.subr.bf16.mxu0 0
    %1447 = vmatpush1.bf16.xpose.msra.mxu0 0
    %1448 = vmatprep.subr.bf16.mxu0 0
    %1449 = vmatpush1.bf16.xpose.msra.mxu0 0
    %1450 = vmatprep.subr.bf16.mxu0 0
    %1451 = vmatpush1.bf16.xpose.msra.mxu0 0
    %1452 = vmatprep.subr.bf16.mxu0 0
    %1453 = vmatpush1.bf16.xpose.msra.mxu0 0
    %1454 = vmatprep.subr.bf16.mxu0 0
    %1455 = vmatpush1.bf16.xpose.msra.mxu0 0
    %1456 = vmatprep.subr.bf16.mxu0 0
    %1457 = vmatpush1.bf16.xpose.msra.mxu0 0
    %1458 = vmatprep.subr.bf16.mxu0 0
    %1459 = vmatpush1.bf16.xpose.msra.mxu0 0
    %1460 = vmatprep.subr.bf16.mxu0 0
    %1461 = vmatpush1.bf16.xpose.msra.mxu0 0
    %1462 = vmatprep.subr.bf16.mxu0 0
    %1463 = vmatpush1.bf16.xpose.msra.mxu0 0
    %1464 = vmatprep.subr.bf16.mxu0 0
    %1465 = vmatpush1.bf16.xpose.msra.mxu0 0
    %1466 = vmatprep.mubr.bf16.mxu0 0
    %1467 = vmatmul.mubr.bf16.gmra.mrb[0].mxu0 %v1429
    %v1468 = vpop.f32.mrb[0].mxu0
    %v1469 = vadd.f32 0.0, %v1468
    %v1470 = vpop.f32.mrb[0].mxu0
    %v1471 = vpop.f32.mrb[0].mxu0
    %v1472 = vpop.f32.mrb[0].mxu0
    %1473 = vdwg.mxu0
    %v1475 = vsel %vm1243, %v640, 0
    %v1478 = vsel %vm1243, %v940, 0
    %1480 = vmatprep.subr.bf16.mxu0 0
    %1481 = vmatpush1.bf16.xpose.msra.mxu0 %v1478
    %1482 = vmatprep.subr.bf16.mxu0 0
    %1483 = vmatpush1.bf16.xpose.msra.mxu0 0
    %1484 = vmatprep.subr.bf16.mxu0 0
    %1485 = vmatpush1.bf16.xpose.msra.mxu0 0
    %1486 = vmatprep.subr.bf16.mxu0 0
    %1487 = vmatpush1.bf16.xpose.msra.mxu0 0
    %1488 = vmatprep.subr.bf16.mxu0 0
    %1489 = vmatpush1.bf16.xpose.msra.mxu0 0
    %1490 = vmatprep.subr.bf16.mxu0 0
    %1491 = vmatpush1.bf16.xpose.msra.mxu0 0
    %1492 = vmatprep.subr.bf16.mxu0 0
    %1493 = vmatpush1.bf16.xpose.msra.mxu0 0
    %1494 = vmatprep.subr.bf16.mxu0 0
    %1495 = vmatpush1.bf16.xpose.msra.mxu0 0
    %1496 = vmatprep.subr.bf16.mxu0 0
    %1497 = vmatpush1.bf16.xpose.msra.mxu0 0
    %1498 = vmatprep.subr.bf16.mxu0 0
    %1499 = vmatpush1.bf16.xpose.msra.mxu0 0
    %1500 = vmatprep.subr.bf16.mxu0 0
    %1501 = vmatpush1.bf16.xpose.msra.mxu0 0
    %1502 = vmatprep.subr.bf16.mxu0 0
    %1503 = vmatpush1.bf16.xpose.msra.mxu0 0
    %1504 = vmatprep.subr.bf16.mxu0 0
    %1505 = vmatpush1.bf16.xpose.msra.mxu0 0
    %1506 = vmatprep.subr.bf16.mxu0 0
    %1507 = vmatpush1.bf16.xpose.msra.mxu0 0
    %1508 = vmatprep.subr.bf16.mxu0 0
    %1509 = vmatpush1.bf16.xpose.msra.mxu0 0
    %1510 = vmatprep.subr.bf16.mxu0 0
    %1511 = vmatpush1.bf16.xpose.msra.mxu0 0
    %1512 = vmatprep.mubr.bf16.mxu0 0
    %1513 = vmatmul.mubr.bf16.gmra.mrb[0].mxu0 %v1475
    %v1514 = vpop.f32.mrb[0].mxu0
    %v1515 = vadd.f32 0.0, %v1514
    %v1516 = vpop.f32.mrb[0].mxu0
    %v1517 = vpop.f32.mrb[0].mxu0
    %v1518 = vpop.f32.mrb[0].mxu0
    %1519 = vdwg.mxu0
    %v1521 = vsel %vm1243, %v641, 0
    %v1524 = vsel %vm1243, %v941, 0
    %1526 = vmatprep.subr.bf16.mxu0 0
    %1527 = vmatpush1.bf16.xpose.msra.mxu0 %v1524
    %1528 = vmatprep.subr.bf16.mxu0 0
    %1529 = vmatpush1.bf16.xpose.msra.mxu0 0
    %1530 = vmatprep.subr.bf16.mxu0 0
    %1531 = vmatpush1.bf16.xpose.msra.mxu0 0
    %1532 = vmatprep.subr.bf16.mxu0 0
    %1533 = vmatpush1.bf16.xpose.msra.mxu0 0
    %1534 = vmatprep.subr.bf16.mxu0 0
    %1535 = vmatpush1.bf16.xpose.msra.mxu0 0
    %1536 = vmatprep.subr.bf16.mxu0 0
    %1537 = vmatpush1.bf16.xpose.msra.mxu0 0
    %1538 = vmatprep.subr.bf16.mxu0 0
    %1539 = vmatpush1.bf16.xpose.msra.mxu0 0
    %1540 = vmatprep.subr.bf16.mxu0 0
    %1541 = vmatpush1.bf16.xpose.msra.mxu0 0
    %1542 = vmatprep.subr.bf16.mxu0 0
    %1543 = vmatpush1.bf16.xpose.msra.mxu0 0
    %1544 = vmatprep.subr.bf16.mxu0 0
    %1545 = vmatpush1.bf16.xpose.msra.mxu0 0
    %1546 = vmatprep.subr.bf16.mxu0 0
    %1547 = vmatpush1.bf16.xpose.msra.mxu0 0
    %1548 = vmatprep.subr.bf16.mxu0 0
    %1549 = vmatpush1.bf16.xpose.msra.mxu0 0
    %1550 = vmatprep.subr.bf16.mxu0 0
    %1551 = vmatpush1.bf16.xpose.msra.mxu0 0
    %1552 = vmatprep.subr.bf16.mxu0 0
    %1553 = vmatpush1.bf16.xpose.msra.mxu0 0
    %1554 = vmatprep.subr.bf16.mxu0 0
    %1555 = vmatpush1.bf16.xpose.msra.mxu0 0
    %1556 = vmatprep.subr.bf16.mxu0 0
    %1557 = vmatpush1.bf16.xpose.msra.mxu0 0
    %1558 = vmatprep.mubr.bf16.mxu0 0
    %1559 = vmatmul.mubr.bf16.gmra.mrb[0].mxu0 %v1521
    %v1560 = vpop.f32.mrb[0].mxu0
    %v1561 = vadd.f32 0.0, %v1560
    %v1562 = vpop.f32.mrb[0].mxu0
    %v1563 = vpop.f32.mrb[0].mxu0
    %v1564 = vpop.f32.mrb[0].mxu0
    %1565 = vdwg.mxu0
    %v1567 = vsel %vm1243, %v642, 0
    %v1570 = vsel %vm1243, %v942, 0
    %1572 = vmatprep.subr.bf16.mxu0 0
    %1573 = vmatpush1.bf16.xpose.msra.mxu0 %v1570
    %1574 = vmatprep.subr.bf16.mxu0 0
    %1575 = vmatpush1.bf16.xpose.msra.mxu0 0
    %1576 = vmatprep.subr.bf16.mxu0 0
    %1577 = vmatpush1.bf16.xpose.msra.mxu0 0
    %1578 = vmatprep.subr.bf16.mxu0 0
    %1579 = vmatpush1.bf16.xpose.msra.mxu0 0
    %1580 = vmatprep.subr.bf16.mxu0 0
    %1581 = vmatpush1.bf16.xpose.msra.mxu0 0
    %1582 = vmatprep.subr.bf16.mxu0 0
    %1583 = vmatpush1.bf16.xpose.msra.mxu0 0
    %1584 = vmatprep.subr.bf16.mxu0 0
    %1585 = vmatpush1.bf16.xpose.msra.mxu0 0
    %1586 = vmatprep.subr.bf16.mxu0 0
    %1587 = vmatpush1.bf16.xpose.msra.mxu0 0
    %1588 = vmatprep.subr.bf16.mxu0 0
    %1589 = vmatpush1.bf16.xpose.msra.mxu0 0
    %1590 = vmatprep.subr.bf16.mxu0 0
    %1591 = vmatpush1.bf16.xpose.msra.mxu0 0
    %1592 = vmatprep.subr.bf16.mxu0 0
    %1593 = vmatpush1.bf16.xpose.msra.mxu0 0
    %1594 = vmatprep.subr.bf16.mxu0 0
    %1595 = vmatpush1.bf16.xpose.msra.mxu0 0
    %1596 = vmatprep.subr.bf16.mxu0 0
    %1597 = vmatpush1.bf16.xpose.msra.mxu0 0
    %1598 = vmatprep.subr.bf16.mxu0 0
    %1599 = vmatpush1.bf16.xpose.msra.mxu0 0
    %1600 = vmatprep.subr.bf16.mxu0 0
    %1601 = vmatpush1.bf16.xpose.msra.mxu0 0
    %1602 = vmatprep.subr.bf16.mxu0 0
    %1603 = vmatpush1.bf16.xpose.msra.mxu0 0
    %1604 = vmatprep.mubr.bf16.mxu0 0
    %1605 = vmatmul.mubr.bf16.gmra.mrb[0].mxu0 %v1567
    %v1606 = vpop.f32.mrb[0].mxu0
    %v1607 = vadd.f32 0.0, %v1606
    %v1608 = vpop.f32.mrb[0].mxu0
    %v1609 = vpop.f32.mrb[0].mxu0
    %v1610 = vpop.f32.mrb[0].mxu0
    %1611 = vdwg.mxu0
    %v1612 = vlaneseq
    %v1613 = vshrl.u32 %v1612, 7
    %v1614 = vlaneseq
    %v1615 = vand.u32 %v1614, 127
    %vm1616 = vcmp.ge.s32.totalorder %v1613, %v1615
    %v1617 = vsel %vm1616, 1, 0
    %vm1618 = vcmp.eq.s32.totalorder %v1617, 1
    %v1619 = vsel %vm1618, %v1285, -inf
    %v1620 = vsel %vm1618, %v1331, -inf
    %v1621 = vsel %vm1618, %v1377, -inf
    %v1622 = vsel %vm1618, %v1423, -inf
    %v1623 = vsel %vm1618, %v1469, -inf
    %v1624 = vsel %vm1618, %v1515, -inf
    %v1625 = vsel %vm1618, %v1561, -inf
    %v1626 = vsel %vm1618, %v1607, -inf
    %v1627 = vsel %vm1243, %v1619, -inf
    %1628 = vmax.xlane.f32.xlu0 %v1627
    %v1629 = vpop.xlane.xlu0 %1628
    %v1630 = vsel %vm1243, %v1620, -inf
    %1631 = vmax.xlane.f32.xlu0 %v1630
    %v1632 = vpop.xlane.xlu0 %1631
    %v1633 = vsel %vm1243, %v1621, -inf
    %1634 = vmax.xlane.f32.xlu0 %v1633
    %v1635 = vpop.xlane.xlu0 %1634
    %v1636 = vsel %vm1243, %v1622, -inf
    %1637 = vmax.xlane.f32.xlu0 %v1636
    %v1638 = vpop.xlane.xlu0 %1637
    %v1639 = vsel %vm1243, %v1623, -inf
    %1640 = vmax.xlane.f32.xlu0 %v1639
    %v1641 = vpop.xlane.xlu0 %1640
    %v1642 = vsel %vm1243, %v1624, -inf
    %1643 = vmax.xlane.f32.xlu0 %v1642
    %v1644 = vpop.xlane.xlu0 %1643
    %v1645 = vsel %vm1243, %v1625, -inf
    %1646 = vmax.xlane.f32.xlu0 %v1645
    %v1647 = vpop.xlane.xlu0 %1646
    %v1648 = vsel %vm1243, %v1626, -inf
    %1649 = vmax.xlane.f32.xlu0 %v1648
    %v1650 = vpop.xlane.xlu0 %1649
    %v1651 = vsub.f32 %v1619, %v1629
    %v1652 = vsub.f32 %v1620, %v1632
    %v1653 = vsub.f32 %v1621, %v1635
    %v1654 = vsub.f32 %v1622, %v1638
    %v1655 = vsub.f32 %v1623, %v1641
    %v1656 = vsub.f32 %v1624, %v1644
    %v1657 = vsub.f32 %v1625, %v1647
    %v1658 = vsub.f32 %v1626, %v1650
    %v1659 = vmul.f32 %v1651, 1.442695
    %v1660 = vpow.pop %v1659
    %v1661 = vmul.f32 %v1652, 1.442695
    %v1662 = vpow.pop %v1661
    %v1663 = vmul.f32 %v1653, 1.442695
    %v1664 = vpow.pop %v1663
    %v1665 = vmul.f32 %v1654, 1.442695
    %v1666 = vpow.pop %v1665
    %v1667 = vmul.f32 %v1655, 1.442695
    %v1668 = vpow.pop %v1667
    %v1669 = vmul.f32 %v1656, 1.442695
    %v1670 = vpow.pop %v1669
    %v1671 = vmul.f32 %v1657, 1.442695
    %v1672 = vpow.pop %v1671
    %v1673 = vmul.f32 %v1658, 1.442695
    %v1674 = vpow.pop %v1673
    %v1675 = vsel %vm1243, %v1660, 0.0
    %1676 = vadd.xlane.f32.xlu0 %v1675
    %v1677 = vpop.xlane.xlu0 %1676
    %v1678 = vsel %vm1243, %v1662, 0.0
    %1679 = vadd.xlane.f32.xlu0 %v1678
    %v1680 = vpop.xlane.xlu0 %1679
    %v1681 = vsel %vm1243, %v1664, 0.0
    %1682 = vadd.xlane.f32.xlu0 %v1681
    %v1683 = vpop.xlane.xlu0 %1682
    %v1684 = vsel %vm1243, %v1666, 0.0
    %1685 = vadd.xlane.f32.xlu0 %v1684
    %v1686 = vpop.xlane.xlu0 %1685
    %v1687 = vsel %vm1243, %v1668, 0.0
    %1688 = vadd.xlane.f32.xlu0 %v1687
    %v1689 = vpop.xlane.xlu0 %1688
    %v1690 = vsel %vm1243, %v1670, 0.0
    %1691 = vadd.xlane.f32.xlu0 %v1690
    %v1692 = vpop.xlane.xlu0 %1691
    %v1693 = vsel %vm1243, %v1672, 0.0
    %1694 = vadd.xlane.f32.xlu0 %v1693
    %v1695 = vpop.xlane.xlu0 %1694
    %v1696 = vsel %vm1243, %v1674, 0.0
    %1697 = vadd.xlane.f32.xlu0 %v1696
    %v1698 = vpop.xlane.xlu0 %1697
    %v1699 = vrcp.pop %v1677
    %v1700 = vrcp.pop %v1680
    %v1701 = vrcp.pop %v1683
    %v1702 = vrcp.pop %v1686
    %v1703 = vrcp.pop %v1689
    %v1704 = vrcp.pop %v1692
    %v1705 = vrcp.pop %v1695
    %v1706 = vrcp.pop %v1698
    %v1707 = vmul.f32 %v1660, %v1699
    %v1708 = vmul.f32 %v1662, %v1700
    %v1709 = vmul.f32 %v1664, %v1701
    %v1710 = vmul.f32 %v1666, %v1702
    %v1711 = vmul.f32 %v1668, %v1703
    %v1712 = vmul.f32 %v1670, %v1704
    %v1713 = vmul.f32 %v1672, %v1705
    %v1714 = vmul.f32 %v1674, %v1706
    %v1715 = vpack.c.bf16 %v1707, %v1707
    %v1716 = vpack.c.bf16 %v1708, %v1708
    %v1717 = vpack.c.bf16 %v1709, %v1709
    %v1718 = vpack.c.bf16 %v1710, %v1710
    %v1719 = vpack.c.bf16 %v1711, %v1711
    %v1720 = vpack.c.bf16 %v1712, %v1712
    %v1721 = vpack.c.bf16 %v1713, %v1713
    %v1722 = vpack.c.bf16 %v1714, %v1714
    %v1724 = vsel %vm1243, %v1715, 0
    %vm1726 = vcmask 1043456
    %v1728 = vsel %vm1726, %v1235, 0
    %1730 = vmatprep.subr.bf16.mxu0 0
    %1731 = vmatpush1.bf16.msra.mxu0 %v1728
    %1732 = vmatprep.subr.bf16.mxu0 0
    %1733 = vmatpush1.bf16.msra.mxu0 0
    %1734 = vmatprep.subr.bf16.mxu0 0
    %1735 = vmatpush1.bf16.msra.mxu0 0
    %1736 = vmatprep.subr.bf16.mxu0 0
    %1737 = vmatpush1.bf16.msra.mxu0 0
    %1738 = vmatprep.subr.bf16.mxu0 0
    %1739 = vmatpush1.bf16.msra.mxu0 0
    %1740 = vmatprep.subr.bf16.mxu0 0
    %1741 = vmatpush1.bf16.msra.mxu0 0
    %1742 = vmatprep.subr.bf16.mxu0 0
    %1743 = vmatpush1.bf16.msra.mxu0 0
    %1744 = vmatprep.subr.bf16.mxu0 0
    %1745 = vmatpush1.bf16.msra.mxu0 0
    %1746 = vmatprep.subr.bf16.mxu0 0
    %1747 = vmatpush1.bf16.msra.mxu0 0
    %1748 = vmatprep.subr.bf16.mxu0 0
    %1749 = vmatpush1.bf16.msra.mxu0 0
    %1750 = vmatprep.subr.bf16.mxu0 0
    %1751 = vmatpush1.bf16.msra.mxu0 0
    %1752 = vmatprep.subr.bf16.mxu0 0
    %1753 = vmatpush1.bf16.msra.mxu0 0
    %1754 = vmatprep.subr.bf16.mxu0 0
    %1755 = vmatpush1.bf16.msra.mxu0 0
    %1756 = vmatprep.subr.bf16.mxu0 0
    %1757 = vmatpush1.bf16.msra.mxu0 0
    %1758 = vmatprep.subr.bf16.mxu0 0
    %1759 = vmatpush1.bf16.msra.mxu0 0
    %1760 = vmatprep.subr.bf16.mxu0 0
    %1761 = vmatpush1.bf16.msra.mxu0 0
    %1762 = vmatprep.mubr.bf16.mxu0 0
    %1763 = vmatmul.mubr.bf16.gmra.mrb[0].mxu0 %v1724
    %v1764 = vpop.f32.mrb[0].mxu0
    %v1765 = vadd.f32 0.0, %v1764
    %v1766 = vpop.f32.mrb[0].mxu0
    %v1767 = vpop.f32.mrb[0].mxu0
    %v1768 = vpop.f32.mrb[0].mxu0
    %1769 = vdwg.mxu0
    %v1771 = vsel %vm1243, %v1716, 0
    %v1774 = vsel %vm1726, %v1236, 0
    %1776 = vmatprep.subr.bf16.mxu0 0
    %1777 = vmatpush1.bf16.msra.mxu0 %v1774
    %1778 = vmatprep.subr.bf16.mxu0 0
    %1779 = vmatpush1.bf16.msra.mxu0 0
    %1780 = vmatprep.subr.bf16.mxu0 0
    %1781 = vmatpush1.bf16.msra.mxu0 0
    %1782 = vmatprep.subr.bf16.mxu0 0
    %1783 = vmatpush1.bf16.msra.mxu0 0
    %1784 = vmatprep.subr.bf16.mxu0 0
    %1785 = vmatpush1.bf16.msra.mxu0 0
    %1786 = vmatprep.subr.bf16.mxu0 0
    %1787 = vmatpush1.bf16.msra.mxu0 0
    %1788 = vmatprep.subr.bf16.mxu0 0
    %1789 = vmatpush1.bf16.msra.mxu0 0
    %1790 = vmatprep.subr.bf16.mxu0 0
    %1791 = vmatpush1.bf16.msra.mxu0 0
    %1792 = vmatprep.subr.bf16.mxu0 0
    %1793 = vmatpush1.bf16.msra.mxu0 0
    %1794 = vmatprep.subr.bf16.mxu0 0
    %1795 = vmatpush1.bf16.msra.mxu0 0
    %1796 = vmatprep.subr.bf16.mxu0 0
    %1797 = vmatpush1.bf16.msra.mxu0 0
    %1798 = vmatprep.subr.bf16.mxu0 0
    %1799 = vmatpush1.bf16.msra.mxu0 0
    %1800 = vmatprep.subr.bf16.mxu0 0
    %1801 = vmatpush1.bf16.msra.mxu0 0
    %1802 = vmatprep.subr.bf16.mxu0 0
    %1803 = vmatpush1.bf16.msra.mxu0 0
    %1804 = vmatprep.subr.bf16.mxu0 0
    %1805 = vmatpush1.bf16.msra.mxu0 0
    %1806 = vmatprep.subr.bf16.mxu0 0
    %1807 = vmatpush1.bf16.msra.mxu0 0
    %1808 = vmatprep.mubr.bf16.mxu0 0
    %1809 = vmatmul.mubr.bf16.gmra.mrb[0].mxu0 %v1771
    %v1810 = vpop.f32.mrb[0].mxu0
    %v1811 = vadd.f32 0.0, %v1810
    %v1812 = vpop.f32.mrb[0].mxu0
    %v1813 = vpop.f32.mrb[0].mxu0
    %v1814 = vpop.f32.mrb[0].mxu0
    %1815 = vdwg.mxu0
    %v1817 = vsel %vm1243, %v1717, 0
    %v1820 = vsel %vm1726, %v1237, 0
    %1822 = vmatprep.subr.bf16.mxu0 0
    %1823 = vmatpush1.bf16.msra.mxu0 %v1820
    %1824 = vmatprep.subr.bf16.mxu0 0
    %1825 = vmatpush1.bf16.msra.mxu0 0
    %1826 = vmatprep.subr.bf16.mxu0 0
    %1827 = vmatpush1.bf16.msra.mxu0 0
    %1828 = vmatprep.subr.bf16.mxu0 0
    %1829 = vmatpush1.bf16.msra.mxu0 0
    %1830 = vmatprep.subr.bf16.mxu0 0
    %1831 = vmatpush1.bf16.msra.mxu0 0
    %1832 = vmatprep.subr.bf16.mxu0 0
    %1833 = vmatpush1.bf16.msra.mxu0 0
    %1834 = vmatprep.subr.bf16.mxu0 0
    %1835 = vmatpush1.bf16.msra.mxu0 0
    %1836 = vmatprep.subr.bf16.mxu0 0
    %1837 = vmatpush1.bf16.msra.mxu0 0
    %1838 = vmatprep.subr.bf16.mxu0 0
    %1839 = vmatpush1.bf16.msra.mxu0 0
    %1840 = vmatprep.subr.bf16.mxu0 0
    %1841 = vmatpush1.bf16.msra.mxu0 0
    %1842 = vmatprep.subr.bf16.mxu0 0
    %1843 = vmatpush1.bf16.msra.mxu0 0
    %1844 = vmatprep.subr.bf16.mxu0 0
    %1845 = vmatpush1.bf16.msra.mxu0 0
    %1846 = vmatprep.subr.bf16.mxu0 0
    %1847 = vmatpush1.bf16.msra.mxu0 0
    %1848 = vmatprep.subr.bf16.mxu0 0
    %1849 = vmatpush1.bf16.msra.mxu0 0
    %1850 = vmatprep.subr.bf16.mxu0 0
    %1851 = vmatpush1.bf16.msra.mxu0 0
    %1852 = vmatprep.subr.bf16.mxu0 0
    %1853 = vmatpush1.bf16.msra.mxu0 0
    %1854 = vmatprep.mubr.bf16.mxu0 0
    %1855 = vmatmul.mubr.bf16.gmra.mrb[0].mxu0 %v1817
    %v1856 = vpop.f32.mrb[0].mxu0
    %v1857 = vadd.f32 0.0, %v1856
    %v1858 = vpop.f32.mrb[0].mxu0
    %v1859 = vpop.f32.mrb[0].mxu0
    %v1860 = vpop.f32.mrb[0].mxu0
    %1861 = vdwg.mxu0
    %v1863 = vsel %vm1243, %v1718, 0
    %v1866 = vsel %vm1726, %v1238, 0
    %1868 = vmatprep.subr.bf16.mxu0 0
    %1869 = vmatpush1.bf16.msra.mxu0 %v1866
    %1870 = vmatprep.subr.bf16.mxu0 0
    %1871 = vmatpush1.bf16.msra.mxu0 0
    %1872 = vmatprep.subr.bf16.mxu0 0
    %1873 = vmatpush1.bf16.msra.mxu0 0
    %1874 = vmatprep.subr.bf16.mxu0 0
    %1875 = vmatpush1.bf16.msra.mxu0 0
    %1876 = vmatprep.subr.bf16.mxu0 0
    %1877 = vmatpush1.bf16.msra.mxu0 0
    %1878 = vmatprep.subr.bf16.mxu0 0
    %1879 = vmatpush1.bf16.msra.mxu0 0
    %1880 = vmatprep.subr.bf16.mxu0 0
    %1881 = vmatpush1.bf16.msra.mxu0 0
    %1882 = vmatprep.subr.bf16.mxu0 0
    %1883 = vmatpush1.bf16.msra.mxu0 0
    %1884 = vmatprep.subr.bf16.mxu0 0
    %1885 = vmatpush1.bf16.msra.mxu0 0
    %1886 = vmatprep.subr.bf16.mxu0 0
    %1887 = vmatpush1.bf16.msra.mxu0 0
    %1888 = vmatprep.subr.bf16.mxu0 0
    %1889 = vmatpush1.bf16.msra.mxu0 0
    %1890 = vmatprep.subr.bf16.mxu0 0
    %1891 = vmatpush1.bf16.msra.mxu0 0
    %1892 = vmatprep.subr.bf16.mxu0 0
    %1893 = vmatpush1.bf16.msra.mxu0 0
    %1894 = vmatprep.subr.bf16.mxu0 0
    %1895 = vmatpush1.bf16.msra.mxu0 0
    %1896 = vmatprep.subr.bf16.mxu0 0
    %1897 = vmatpush1.bf16.msra.mxu0 0
    %1898 = vmatprep.subr.bf16.mxu0 0
    %1899 = vmatpush1.bf16.msra.mxu0 0
    %1900 = vmatprep.mubr.bf16.mxu0 0
    %1901 = vmatmul.mubr.bf16.gmra.mrb[0].mxu0 %v1863
    %v1902 = vpop.f32.mrb[0].mxu0
    %v1903 = vadd.f32 0.0, %v1902
    %v1904 = vpop.f32.mrb[0].mxu0
    %v1905 = vpop.f32.mrb[0].mxu0
    %v1906 = vpop.f32.mrb[0].mxu0
    %1907 = vdwg.mxu0
    %v1909 = vsel %vm1243, %v1719, 0
    %v1912 = vsel %vm1726, %v1239, 0
    %1914 = vmatprep.subr.bf16.mxu0 0
    %1915 = vmatpush1.bf16.msra.mxu0 %v1912
    %1916 = vmatprep.subr.bf16.mxu0 0
    %1917 = vmatpush1.bf16.msra.mxu0 0
    %1918 = vmatprep.subr.bf16.mxu0 0
    %1919 = vmatpush1.bf16.msra.mxu0 0
    %1920 = vmatprep.subr.bf16.mxu0 0
    %1921 = vmatpush1.bf16.msra.mxu0 0
    %1922 = vmatprep.subr.bf16.mxu0 0
    %1923 = vmatpush1.bf16.msra.mxu0 0
    %1924 = vmatprep.subr.bf16.mxu0 0
    %1925 = vmatpush1.bf16.msra.mxu0 0
    %1926 = vmatprep.subr.bf16.mxu0 0
    %1927 = vmatpush1.bf16.msra.mxu0 0
    %1928 = vmatprep.subr.bf16.mxu0 0
    %1929 = vmatpush1.bf16.msra.mxu0 0
    %1930 = vmatprep.subr.bf16.mxu0 0
    %1931 = vmatpush1.bf16.msra.mxu0 0
    %1932 = vmatprep.subr.bf16.mxu0 0
    %1933 = vmatpush1.bf16.msra.mxu0 0
    %1934 = vmatprep.subr.bf16.mxu0 0
    %1935 = vmatpush1.bf16.msra.mxu0 0
    %1936 = vmatprep.subr.bf16.mxu0 0
    %1937 = vmatpush1.bf16.msra.mxu0 0
    %1938 = vmatprep.subr.bf16.mxu0 0
    %1939 = vmatpush1.bf16.msra.mxu0 0
    %1940 = vmatprep.subr.bf16.mxu0 0
    %1941 = vmatpush1.bf16.msra.mxu0 0
    %1942 = vmatprep.subr.bf16.mxu0 0
    %1943 = vmatpush1.bf16.msra.mxu0 0
    %1944 = vmatprep.subr.bf16.mxu0 0
    %1945 = vmatpush1.bf16.msra.mxu0 0
    %1946 = vmatprep.mubr.bf16.mxu0 0
    %1947 = vmatmul.mubr.bf16.gmra.mrb[0].mxu0 %v1909
    %v1948 = vpop.f32.mrb[0].mxu0
    %v1949 = vadd.f32 0.0, %v1948
    %v1950 = vpop.f32.mrb[0].mxu0
    %v1951 = vpop.f32.mrb[0].mxu0
    %v1952 = vpop.f32.mrb[0].mxu0
    %1953 = vdwg.mxu0
    %v1955 = vsel %vm1243, %v1720, 0
    %v1958 = vsel %vm1726, %v1240, 0
    %1960 = vmatprep.subr.bf16.mxu0 0
    %1961 = vmatpush1.bf16.msra.mxu0 %v1958
    %1962 = vmatprep.subr.bf16.mxu0 0
    %1963 = vmatpush1.bf16.msra.mxu0 0
    %1964 = vmatprep.subr.bf16.mxu0 0
    %1965 = vmatpush1.bf16.msra.mxu0 0
    %1966 = vmatprep.subr.bf16.mxu0 0
    %1967 = vmatpush1.bf16.msra.mxu0 0
    %1968 = vmatprep.subr.bf16.mxu0 0
    %1969 = vmatpush1.bf16.msra.mxu0 0
    %1970 = vmatprep.subr.bf16.mxu0 0
    %1971 = vmatpush1.bf16.msra.mxu0 0
    %1972 = vmatprep.subr.bf16.mxu0 0
    %1973 = vmatpush1.bf16.msra.mxu0 0
    %1974 = vmatprep.subr.bf16.mxu0 0
    %1975 = vmatpush1.bf16.msra.mxu0 0
    %1976 = vmatprep.subr.bf16.mxu0 0
    %1977 = vmatpush1.bf16.msra.mxu0 0
    %1978 = vmatprep.subr.bf16.mxu0 0
    %1979 = vmatpush1.bf16.msra.mxu0 0
    %1980 = vmatprep.subr.bf16.mxu0 0
    %1981 = vmatpush1.bf16.msra.mxu0 0
    %1982 = vmatprep.subr.bf16.mxu0 0
    %1983 = vmatpush1.bf16.msra.mxu0 0
    %1984 = vmatprep.subr.bf16.mxu0 0
    %1985 = vmatpush1.bf16.msra.mxu0 0
    %1986 = vmatprep.subr.bf16.mxu0 0
    %1987 = vmatpush1.bf16.msra.mxu0 0
    %1988 = vmatprep.subr.bf16.mxu0 0
    %1989 = vmatpush1.bf16.msra.mxu0 0
    %1990 = vmatprep.subr.bf16.mxu0 0
    %1991 = vmatpush1.bf16.msra.mxu0 0
    %1992 = vmatprep.mubr.bf16.mxu0 0
    %1993 = vmatmul.mubr.bf16.gmra.mrb[0].mxu0 %v1955
    %v1994 = vpop.f32.mrb[0].mxu0
    %v1995 = vadd.f32 0.0, %v1994
    %v1996 = vpop.f32.mrb[0].mxu0
    %v1997 = vpop.f32.mrb[0].mxu0
    %v1998 = vpop.f32.mrb[0].mxu0
    %1999 = vdwg.mxu0
    %v2001 = vsel %vm1243, %v1721, 0
    %v2004 = vsel %vm1726, %v1241, 0
    %2006 = vmatprep.subr.bf16.mxu0 0
    %2007 = vmatpush1.bf16.msra.mxu0 %v2004
    %2008 = vmatprep.subr.bf16.mxu0 0
    %2009 = vmatpush1.bf16.msra.mxu0 0
    %2010 = vmatprep.subr.bf16.mxu0 0
    %2011 = vmatpush1.bf16.msra.mxu0 0
    %2012 = vmatprep.subr.bf16.mxu0 0
    %2013 = vmatpush1.bf16.msra.mxu0 0
    %2014 = vmatprep.subr.bf16.mxu0 0
    %2015 = vmatpush1.bf16.msra.mxu0 0
    %2016 = vmatprep.subr.bf16.mxu0 0
    %2017 = vmatpush1.bf16.msra.mxu0 0
    %2018 = vmatprep.subr.bf16.mxu0 0
    %2019 = vmatpush1.bf16.msra.mxu0 0
    %2020 = vmatprep.subr.bf16.mxu0 0
    %2021 = vmatpush1.bf16.msra.mxu0 0
    %2022 = vmatprep.subr.bf16.mxu0 0
    %2023 = vmatpush1.bf16.msra.mxu0 0
    %2024 = vmatprep.subr.bf16.mxu0 0
    %2025 = vmatpush1.bf16.msra.mxu0 0
    %2026 = vmatprep.subr.bf16.mxu0 0
    %2027 = vmatpush1.bf16.msra.mxu0 0
    %2028 = vmatprep.subr.bf16.mxu0 0
    %2029 = vmatpush1.bf16.msra.mxu0 0
    %2030 = vmatprep.subr.bf16.mxu0 0
    %2031 = vmatpush1.bf16.msra.mxu0 0
    %2032 = vmatprep.subr.bf16.mxu0 0
    %2033 = vmatpush1.bf16.msra.mxu0 0
    %2034 = vmatprep.subr.bf16.mxu0 0
    %2035 = vmatpush1.bf16.msra.mxu0 0
    %2036 = vmatprep.subr.bf16.mxu0 0
    %2037 = vmatpush1.bf16.msra.mxu0 0
    %2038 = vmatprep.mubr.bf16.mxu0 0
    %2039 = vmatmul.mubr.bf16.gmra.mrb[0].mxu0 %v2001
    %v2040 = vpop.f32.mrb[0].mxu0
    %v2041 = vadd.f32 0.0, %v2040
    %v2042 = vpop.f32.mrb[0].mxu0
    %v2043 = vpop.f32.mrb[0].mxu0
    %v2044 = vpop.f32.mrb[0].mxu0
    %2045 = vdwg.mxu0
    %v2047 = vsel %vm1243, %v1722, 0
    %v2050 = vsel %vm1726, %v1242, 0
    %2052 = vmatprep.subr.bf16.mxu0 0
    %2053 = vmatpush1.bf16.msra.mxu0 %v2050
    %2054 = vmatprep.subr.bf16.mxu0 0
    %2055 = vmatpush1.bf16.msra.mxu0 0
    %2056 = vmatprep.subr.bf16.mxu0 0
    %2057 = vmatpush1.bf16.msra.mxu0 0
    %2058 = vmatprep.subr.bf16.mxu0 0
    %2059 = vmatpush1.bf16.msra.mxu0 0
    %2060 = vmatprep.subr.bf16.mxu0 0
    %2061 = vmatpush1.bf16.msra.mxu0 0
    %2062 = vmatprep.subr.bf16.mxu0 0
    %2063 = vmatpush1.bf16.msra.mxu0 0
    %2064 = vmatprep.subr.bf16.mxu0 0
    %2065 = vmatpush1.bf16.msra.mxu0 0
    %2066 = vmatprep.subr.bf16.mxu0 0
    %2067 = vmatpush1.bf16.msra.mxu0 0
    %2068 = vmatprep.subr.bf16.mxu0 0
    %2069 = vmatpush1.bf16.msra.mxu0 0
    %2070 = vmatprep.subr.bf16.mxu0 0
    %2071 = vmatpush1.bf16.msra.mxu0 0
    %2072 = vmatprep.subr.bf16.mxu0 0
    %2073 = vmatpush1.bf16.msra.mxu0 0
    %2074 = vmatprep.subr.bf16.mxu0 0
    %2075 = vmatpush1.bf16.msra.mxu0 0
    %2076 = vmatprep.subr.bf16.mxu0 0
    %2077 = vmatpush1.bf16.msra.mxu0 0
    %2078 = vmatprep.subr.bf16.mxu0 0
    %2079 = vmatpush1.bf16.msra.mxu0 0
    %2080 = vmatprep.subr.bf16.mxu0 0
    %2081 = vmatpush1.bf16.msra.mxu0 0
    %2082 = vmatprep.subr.bf16.mxu0 0
    %2083 = vmatpush1.bf16.msra.mxu0 0
    %2084 = vmatprep.mubr.bf16.mxu0 0
    %2085 = vmatmul.mubr.bf16.gmra.mrb[0].mxu0 %v2047
    %v2086 = vpop.f32.mrb[0].mxu0
    %v2087 = vadd.f32 0.0, %v2086
    %v2088 = vpop.f32.mrb[0].mxu0
    %v2089 = vpop.f32.mrb[0].mxu0
    %v2090 = vpop.f32.mrb[0].mxu0
    %2091 = vdwg.mxu0
    %v2092 = vcombine.low %v1765, %v1857
    %v2093 = vcombine.high %v1765, %v1857
    %v2095 = vunpack.c.l.s4 1983009808
    %v2096 = vunpack.c.0.s8 %v2095
    %v2097 = vlaneseq
    %v2098 = vshrl.u32 %v2097, 7
    %v2099 = vsub.s32 %v2096, %v2098
    %v2100 = vrot.slane %v2092, %v2099
    %v2102 = vunpack.c.l.s4 1983009808
    %v2103 = vunpack.c.0.s8 %v2102
    %v2104 = vlaneseq
    %v2105 = vshrl.u32 %v2104, 7
    %v2106 = vsub.s32 %v2103, %v2105
    %v2107 = vrot.slane %v2093, %v2106
    %v2108 = vcombine.low %v1811, %v1903
    %v2109 = vcombine.high %v1811, %v1903
    %v2111 = vunpack.c.l.s4 1983009808
    %v2112 = vunpack.c.0.s8 %v2111
    %v2113 = vlaneseq
    %v2114 = vshrl.u32 %v2113, 7
    %v2115 = vsub.s32 %v2112, %v2114
    %v2116 = vrot.slane %v2108, %v2115
    %v2118 = vunpack.c.l.s4 1983009808
    %v2119 = vunpack.c.0.s8 %v2118
    %v2120 = vlaneseq
    %v2121 = vshrl.u32 %v2120, 7
    %v2122 = vsub.s32 %v2119, %v2121
    %v2123 = vrot.slane %v2109, %v2122
    %v2124 = vcombine.low %v2100, %v2116
    %v2125 = vcombine.high %v2100, %v2116
    %v2127 = vunpack.c.l.s4 1934713408
    %v2128 = vunpack.c.0.s8 %v2127
    %v2129 = vlaneseq
    %v2130 = vshrl.u32 %v2129, 7
    %v2131 = vsub.s32 %v2128, %v2130
    %v2132 = vrot.slane %v2124, %v2131
    %v2134 = vunpack.c.l.s4 1934713408
    %v2135 = vunpack.c.0.s8 %v2134
    %v2136 = vlaneseq
    %v2137 = vshrl.u32 %v2136, 7
    %v2138 = vsub.s32 %v2135, %v2137
    %v2139 = vrot.slane %v2125, %v2138
    %v2140 = vcombine.low %v2107, %v2123
    %v2141 = vcombine.high %v2107, %v2123
    %v2143 = vunpack.c.l.s4 1934713408
    %v2144 = vunpack.c.0.s8 %v2143
    %v2145 = vlaneseq
    %v2146 = vshrl.u32 %v2145, 7
    %v2147 = vsub.s32 %v2144, %v2146
    %v2148 = vrot.slane %v2140, %v2147
    %v2150 = vunpack.c.l.s4 1934713408
    %v2151 = vunpack.c.0.s8 %v2150
    %v2152 = vlaneseq
    %v2153 = vshrl.u32 %v2152, 7
    %v2154 = vsub.s32 %v2151, %v2153
    %v2155 = vrot.slane %v2141, %v2154
    %v2156 = vcombine.high %v2132, 0.0
    %v2157 = vcombine.high %v2139, 0.0
    %v2158 = vcombine.high %v2148, 0.0
    %v2159 = vcombine.high %v2155, 0.0
    %v2160 = vcombine.low %v1949, %v2041
    %v2161 = vcombine.high %v1949, %v2041
    %v2163 = vunpack.c.l.s4 1983009808
    %v2164 = vunpack.c.0.s8 %v2163
    %v2165 = vlaneseq
    %v2166 = vshrl.u32 %v2165, 7
    %v2167 = vsub.s32 %v2164, %v2166
    %v2168 = vrot.slane %v2160, %v2167
    %v2170 = vunpack.c.l.s4 1983009808
    %v2171 = vunpack.c.0.s8 %v2170
    %v2172 = vlaneseq
    %v2173 = vshrl.u32 %v2172, 7
    %v2174 = vsub.s32 %v2171, %v2173
    %v2175 = vrot.slane %v2161, %v2174
    %v2176 = vcombine.low %v1995, %v2087
    %v2177 = vcombine.high %v1995, %v2087
    %v2179 = vunpack.c.l.s4 1983009808
    %v2180 = vunpack.c.0.s8 %v2179
    %v2181 = vlaneseq
    %v2182 = vshrl.u32 %v2181, 7
    %v2183 = vsub.s32 %v2180, %v2182
    %v2184 = vrot.slane %v2176, %v2183
    %v2186 = vunpack.c.l.s4 1983009808
    %v2187 = vunpack.c.0.s8 %v2186
    %v2188 = vlaneseq
    %v2189 = vshrl.u32 %v2188, 7
    %v2190 = vsub.s32 %v2187, %v2189
    %v2191 = vrot.slane %v2177, %v2190
    %v2192 = vcombine.low %v2168, %v2184
    %v2193 = vcombine.high %v2168, %v2184
    %v2195 = vunpack.c.l.s4 1934713408
    %v2196 = vunpack.c.0.s8 %v2195
    %v2197 = vlaneseq
    %v2198 = vshrl.u32 %v2197, 7
    %v2199 = vsub.s32 %v2196, %v2198
    %v2200 = vrot.slane %v2192, %v2199
    %v2202 = vunpack.c.l.s4 1934713408
    %v2203 = vunpack.c.0.s8 %v2202
    %v2204 = vlaneseq
    %v2205 = vshrl.u32 %v2204, 7
    %v2206 = vsub.s32 %v2203, %v2205
    %v2207 = vrot.slane %v2193, %v2206
    %v2208 = vcombine.low %v2175, %v2191
    %v2209 = vcombine.high %v2175, %v2191
    %v2211 = vunpack.c.l.s4 1934713408
    %v2212 = vunpack.c.0.s8 %v2211
    %v2213 = vlaneseq
    %v2214 = vshrl.u32 %v2213, 7
    %v2215 = vsub.s32 %v2212, %v2214
    %v2216 = vrot.slane %v2208, %v2215
    %v2218 = vunpack.c.l.s4 1934713408
    %v2219 = vunpack.c.0.s8 %v2218
    %v2220 = vlaneseq
    %v2221 = vshrl.u32 %v2220, 7
    %v2222 = vsub.s32 %v2219, %v2221
    %v2223 = vrot.slane %v2209, %v2222
    %v2224 = vcombine.high %v2200, 0.0
    %v2225 = vcombine.high %v2207, 0.0
    %v2226 = vcombine.high %v2216, 0.0
    %v2227 = vcombine.high %v2223, 0.0
    %v2228 = vcombine.low %v2132, %v2139
    %v2230 = vunpack.c.l.s4 1983009808
    %v2231 = vunpack.c.0.s8 %v2230
    %v2232 = vlaneseq
    %v2233 = vshrl.u32 %v2232, 7
    %v2234 = vsub.s32 %v2231, %v2233
    %v2235 = vrot.slane %v2228, %v2234
    %v2236 = vcombine.low %v2156, %v2157
    %v2238 = vunpack.c.l.s4 1983009808
    %v2239 = vunpack.c.0.s8 %v2238
    %v2240 = vlaneseq
    %v2241 = vshrl.u32 %v2240, 7
    %v2242 = vsub.s32 %v2239, %v2241
    %v2243 = vrot.slane %v2236, %v2242
    %v2244 = vcombine.low %v2148, %v2155
    %v2246 = vunpack.c.l.s4 1983009808
    %v2247 = vunpack.c.0.s8 %v2246
    %v2248 = vlaneseq
    %v2249 = vshrl.u32 %v2248, 7
    %v2250 = vsub.s32 %v2247, %v2249
    %v2251 = vrot.slane %v2244, %v2250
    %v2252 = vcombine.low %v2158, %v2159
    %v2254 = vunpack.c.l.s4 1983009808
    %v2255 = vunpack.c.0.s8 %v2254
    %v2256 = vlaneseq
    %v2257 = vshrl.u32 %v2256, 7
    %v2258 = vsub.s32 %v2255, %v2257
    %v2259 = vrot.slane %v2252, %v2258
    %v2260 = vcombine.low %v2235, %v2243
    %v2261 = vcombine.high %v2235, %v2243
    %v2263 = vunpack.c.l.s4 1934713408
    %v2264 = vunpack.c.0.s8 %v2263
    %v2265 = vlaneseq
    %v2266 = vshrl.u32 %v2265, 7
    %v2267 = vsub.s32 %v2264, %v2266
    %v2268 = vrot.slane %v2260, %v2267
    %v2270 = vunpack.c.l.s4 1934713408
    %v2271 = vunpack.c.0.s8 %v2270
    %v2272 = vlaneseq
    %v2273 = vshrl.u32 %v2272, 7
    %v2274 = vsub.s32 %v2271, %v2273
    %v2275 = vrot.slane %v2261, %v2274
    %v2276 = vcombine.low %v2251, %v2259
    %v2277 = vcombine.high %v2251, %v2259
    %v2279 = vunpack.c.l.s4 1934713408
    %v2280 = vunpack.c.0.s8 %v2279
    %v2281 = vlaneseq
    %v2282 = vshrl.u32 %v2281, 7
    %v2283 = vsub.s32 %v2280, %v2282
    %v2284 = vrot.slane %v2276, %v2283
    %v2286 = vunpack.c.l.s4 1934713408
    %v2287 = vunpack.c.0.s8 %v2286
    %v2288 = vlaneseq
    %v2289 = vshrl.u32 %v2288, 7
    %v2290 = vsub.s32 %v2287, %v2289
    %v2291 = vrot.slane %v2277, %v2290
    %v2292 = vcombine.low %v2268, %v2284
    %v2293 = vcombine.high %v2268, %v2284
    %v2294 = vcombine.low %v2275, %v2291
    %v2295 = vcombine.high %v2275, %v2291
    %v2296 = vcombine.low %v2200, %v2207
    %v2298 = vunpack.c.l.s4 1983009808
    %v2299 = vunpack.c.0.s8 %v2298
    %v2300 = vlaneseq
    %v2301 = vshrl.u32 %v2300, 7
    %v2302 = vsub.s32 %v2299, %v2301
    %v2303 = vrot.slane %v2296, %v2302
    %v2304 = vcombine.low %v2224, %v2225
    %v2306 = vunpack.c.l.s4 1983009808
    %v2307 = vunpack.c.0.s8 %v2306
    %v2308 = vlaneseq
    %v2309 = vshrl.u32 %v2308, 7
    %v2310 = vsub.s32 %v2307, %v2309
    %v2311 = vrot.slane %v2304, %v2310
    %v2312 = vcombine.low %v2216, %v2223
    %v2314 = vunpack.c.l.s4 1983009808
    %v2315 = vunpack.c.0.s8 %v2314
    %v2316 = vlaneseq
    %v2317 = vshrl.u32 %v2316, 7
    %v2318 = vsub.s32 %v2315, %v2317
    %v2319 = vrot.slane %v2312, %v2318
    %v2320 = vcombine.low %v2226, %v2227
    %v2322 = vunpack.c.l.s4 1983009808
    %v2323 = vunpack.c.0.s8 %v2322
    %v2324 = vlaneseq
    %v2325 = vshrl.u32 %v2324, 7
    %v2326 = vsub.s32 %v2323, %v2325
    %v2327 = vrot.slane %v2320, %v2326
    %v2328 = vcombine.low %v2303, %v2311
    %v2329 = vcombine.high %v2303, %v2311
    %v2331 = vunpack.c.l.s4 1934713408
    %v2332 = vunpack.c.0.s8 %v2331
    %v2333 = vlaneseq
    %v2334 = vshrl.u32 %v2333, 7
    %v2335 = vsub.s32 %v2332, %v2334
    %v2336 = vrot.slane %v2328, %v2335
    %v2338 = vunpack.c.l.s4 1934713408
    %v2339 = vunpack.c.0.s8 %v2338
    %v2340 = vlaneseq
    %v2341 = vshrl.u32 %v2340, 7
    %v2342 = vsub.s32 %v2339, %v2341
    %v2343 = vrot.slane %v2329, %v2342
    %v2344 = vcombine.low %v2319, %v2327
    %v2345 = vcombine.high %v2319, %v2327
    %v2347 = vunpack.c.l.s4 1934713408
    %v2348 = vunpack.c.0.s8 %v2347
    %v2349 = vlaneseq
    %v2350 = vshrl.u32 %v2349, 7
    %v2351 = vsub.s32 %v2348, %v2350
    %v2352 = vrot.slane %v2344, %v2351
    %v2354 = vunpack.c.l.s4 1934713408
    %v2355 = vunpack.c.0.s8 %v2354
    %v2356 = vlaneseq
    %v2357 = vshrl.u32 %v2356, 7
    %v2358 = vsub.s32 %v2355, %v2357
    %v2359 = vrot.slane %v2345, %v2358
    %v2360 = vcombine.low %v2336, %v2352
    %v2361 = vcombine.high %v2336, %v2352
    %v2362 = vcombine.low %v2343, %v2359
    %v2363 = vcombine.high %v2343, %v2359
    %2366 = vrot.lane.b32.xlu0 %v2293, 8
    %v2367 = vpop.permute.xlu0 %2366
    %2368 = vrot.lane.b32.xlu0 %v2361, 8
    %v2369 = vpop.permute.xlu0 %2368
    %2374 = vrot.lane.b32.xlu0 %v2294, 16
    %v2375 = vpop.permute.xlu0 %2374
    %2376 = vrot.lane.b32.xlu0 %v2362, 16
    %v2377 = vpop.permute.xlu0 %2376
    %2382 = vrot.lane.b32.xlu0 %v2295, 24
    %v2383 = vpop.permute.xlu0 %2382
    %2384 = vrot.lane.b32.xlu0 %v2363, 24
    %v2385 = vpop.permute.xlu0 %2384
    %v2388 = vsel %vm1243, %v2292, %v2367
    %v2389 = vsel %vm1243, %v2360, %v2369
    %vm2390 = vcmask 130048
    %v2391 = vsel %vm2390, %v2388, %v2375
    %v2392 = vsel %vm2390, %v2389, %v2377
    %vm2393 = vcmask 195584
    %v2394 = vsel %vm2393, %v2391, %v2383
    %v2395 = vsel %vm2393, %v2392, %v2385
    %v2396 = vpack.c.bf16 %v2395, %v2394
    %v2397 = vld [vmem:[%s5] sm:$0xf]
    %v2398 = vld [vmem:[%s5 + $0x4] sm:$0xf]
    %v2399 = vld [vmem:[%s5 + $0x8] sm:$0xf]
    %v2400 = vld [vmem:[%s5 + $0xc] sm:$0xf]
    %v2401 = vld [vmem:[#allocation5] sm:$0x1]
    %v2403 = vlaneseq
    %v2404 = vshrl.u32 %v2403, 7
    %v2405 = vsub.s32 0, %v2404
    %v2406 = vrot.slane %v2401, %v2405
    %v2412 = vunpack.c.l.b16 %v2397
    %v2413 = vunpack.c.l.b16 %v2398
    %v2414 = vunpack.c.l.b16 %v2399
    %v2415 = vunpack.c.l.b16 %v2400
    %v2416 = vpack.c.b16 %v2413, %v2412
    %v2417 = vpack.c.b16 %v2415, %v2414
    %v2421 = vsel %vm99, %v2396, 0
    %2423 = vmatprep.subr.bf16.mxu0 0
    %2424 = vmatpush1.bf16.msra.mxu0 %v2416
    %2425 = vmatprep.subr.bf16.mxu0 0
    %2426 = vmatpush1.bf16.msra.mxu0 %v2417
    %2427 = vmatprep.subr.bf16.mxu0 0
    %2428 = vmatpush1.bf16.msra.mxu0 0
    %2429 = vmatprep.subr.bf16.mxu0 0
    %2430 = vmatpush1.bf16.msra.mxu0 0
    %2431 = vmatprep.subr.bf16.mxu0 0
    %2432 = vmatpush1.bf16.msra.mxu0 0
    %2433 = vmatprep.subr.bf16.mxu0 0
    %2434 = vmatpush1.bf16.msra.mxu0 0
    %2435 = vmatprep.subr.bf16.mxu0 0
    %2436 = vmatpush1.bf16.msra.mxu0 0
    %2437 = vmatprep.subr.bf16.mxu0 0
    %2438 = vmatpush1.bf16.msra.mxu0 0
    %2439 = vmatprep.subr.bf16.mxu0 0
    %2440 = vmatpush1.bf16.msra.mxu0 0
    %2441 = vmatprep.subr.bf16.mxu0 0
    %2442 = vmatpush1.bf16.msra.mxu0 0
    %2443 = vmatprep.subr.bf16.mxu0 0
    %2444 = vmatpush1.bf16.msra.mxu0 0
    %2445 = vmatprep.subr.bf16.mxu0 0
    %2446 = vmatpush1.bf16.msra.mxu0 0
    %2447 = vmatprep.subr.bf16.mxu0 0
    %2448 = vmatpush1.bf16.msra.mxu0 0
    %2449 = vmatprep.subr.bf16.mxu0 0
    %2450 = vmatpush1.bf16.msra.mxu0 0
    %2451 = vmatprep.subr.bf16.mxu0 0
    %2452 = vmatpush1.bf16.msra.mxu0 0
    %2453 = vmatprep.subr.bf16.mxu0 0
    %2454 = vmatpush1.bf16.msra.mxu0 0
    %2455 = vmatprep.mubr.bf16.mxu0 0
    %2456 = vmatmul.mubr.bf16.gmra.mrb[0].mxu0 %v2421
    %v2457 = vpop.f32.mrb[0].mxu0
    %v2458 = vadd.f32 %v2406, %v2457
    %v2459 = vpop.f32.mrb[0].mxu0
    %v2460 = vpop.f32.mrb[0].mxu0
    %v2461 = vadd.f32 %v2406, %v2460
    %v2462 = vpop.f32.mrb[0].mxu0
    %2463 = vdwg.mxu0
    %v2464 = vadd.f32 %v95, %v2458
    %v2465 = vadd.f32 %v96, %v2461
    %v2466 = vld [vmem:[#allocation7] sm:$0x1]
    %v2467 = vld [vmem:[#allocation8] sm:$0x1]
    %v2468 = vsel %vm99, %v2464, 0.0
    %2469 = vadd.xlane.f32.xlu0 %v2468
    %v2470 = vpop.xlane.xlu0 %2469
    %v2471 = vsel %vm99, %v2465, 0.0
    %2472 = vadd.xlane.f32.xlu0 %v2471
    %v2473 = vpop.xlane.xlu0 %2472
    %v2474 = vmul.f32 %v2470, %v106
    %v2475 = vmul.f32 %v2473, %v106
    %v2476 = vsub.f32 %v2464, %v2474
    %v2477 = vsub.f32 %v2465, %v2475
    %v2478 = vmul.f32 %v2476, %v2476
    %v2479 = vmul.f32 %v2477, %v2477
    %v2480 = vsel %vm99, %v2478, 0.0
    %2481 = vadd.xlane.f32.xlu0 %v2480
    %v2482 = vpop.xlane.xlu0 %2481
    %v2483 = vsel %vm99, %v2479, 0.0
    %2484 = vadd.xlane.f32.xlu0 %v2483
    %v2485 = vpop.xlane.xlu0 %2484
    %v2486 = vmul.f32 %v2482, %v106
    %v2487 = vmul.f32 %v2485, %v106
    %v2488 = vadd.f32 %v2486, 1e-05
    %v2489 = vadd.f32 %v2487, 1e-05
    %v2490 = vrsqrt.pop %v2488
    %v2491 = vrsqrt.pop %v2489
    %v2492 = vmul.f32 %v2476, %v2490
    %v2493 = vmul.f32 %v2477, %v2491
    %v2495 = vlaneseq
    %v2496 = vshrl.u32 %v2495, 7
    %v2497 = vsub.s32 0, %v2496
    %v2498 = vrot.slane %v2466, %v2497
    %v2500 = vmul.f32 %v2492, %v2498
    %v2501 = vmul.f32 %v2493, %v2498
    %v2503 = vlaneseq
    %v2504 = vshrl.u32 %v2503, 7
    %v2505 = vsub.s32 0, %v2504
    %v2506 = vrot.slane %v2467, %v2505
    %v2508 = vadd.f32 %v2500, %v2506
    %v2509 = vadd.f32 %v2501, %v2506
    %v2510 = vpack.c.bf16 %v2509, %v2508
    %v2511 = vld [vmem:[%s9] sm:$0xf]
    %v2512 = vld [vmem:[%s9 + $0x4] sm:$0xf]
    %v2513 = vld [vmem:[%s9 + $0x8] sm:$0xf]
    %v2514 = vld [vmem:[%s9 + $0xc] sm:$0xf]
    %v2515 = vld [vmem:[%s10] sm:$0x1]
    %v2517 = vlaneseq
    %v2518 = vshrl.u32 %v2517, 7
    %v2519 = vsub.s32 0, %v2518
    %v2520 = vrot.slane %v2515, %v2519
    %v2526 = vunpack.c.l.b16 %v2511
    %v2527 = vunpack.c.l.b16 %v2512
    %v2528 = vunpack.c.l.b16 %v2513
    %v2529 = vunpack.c.l.b16 %v2514
    %v2530 = vpack.c.b16 %v2527, %v2526
    %v2531 = vpack.c.b16 %v2529, %v2528
    %v2535 = vsel %vm99, %v2510, 0
    %2537 = vmatprep.subr.bf16.mxu0 0
    %2538 = vmatpush1.bf16.msra.mxu0 %v2530
    %2539 = vmatprep.subr.bf16.mxu0 0
    %2540 = vmatpush1.bf16.msra.mxu0 %v2531
    %2541 = vmatprep.subr.bf16.mxu0 0
    %2542 = vmatpush1.bf16.msra.mxu0 0
    %2543 = vmatprep.subr.bf16.mxu0 0
    %2544 = vmatpush1.bf16.msra.mxu0 0
    %2545 = vmatprep.subr.bf16.mxu0 0
    %2546 = vmatpush1.bf16.msra.mxu0 0
    %2547 = vmatprep.subr.bf16.mxu0 0
    %2548 = vmatpush1.bf16.msra.mxu0 0
    %2549 = vmatprep.subr.bf16.mxu0 0
    %2550 = vmatpush1.bf16.msra.mxu0 0
    %2551 = vmatprep.subr.bf16.mxu0 0
    %2552 = vmatpush1.bf16.msra.mxu0 0
    %2553 = vmatprep.subr.bf16.mxu0 0
    %2554 = vmatpush1.bf16.msra.mxu0 0
    %2555 = vmatprep.subr.bf16.mxu0 0
    %2556 = vmatpush1.bf16.msra.mxu0 0
    %2557 = vmatprep.subr.bf16.mxu0 0
    %2558 = vmatpush1.bf16.msra.mxu0 0
    %2559 = vmatprep.subr.bf16.mxu0 0
    %2560 = vmatpush1.bf16.msra.mxu0 0
    %2561 = vmatprep.subr.bf16.mxu0 0
    %2562 = vmatpush1.bf16.msra.mxu0 0
    %2563 = vmatprep.subr.bf16.mxu0 0
    %2564 = vmatpush1.bf16.msra.mxu0 0
    %2565 = vmatprep.subr.bf16.mxu0 0
    %2566 = vmatpush1.bf16.msra.mxu0 0
    %2567 = vmatprep.subr.bf16.mxu0 0
    %2568 = vmatpush1.bf16.msra.mxu0 0
    %2569 = vmatprep.mubr.bf16.mxu0 0
    %2570 = vmatmul.mubr.bf16.gmra.mrb[0].mxu0 %v2535
    %v2571 = vpop.f32.mrb[0].mxu0
    %v2572 = vadd.f32 %v2520, %v2571
    %v2573 = vpop.f32.mrb[0].mxu0
    %v2574 = vpop.f32.mrb[0].mxu0
    %v2575 = vadd.f32 %v2520, %v2574
    %v2576 = vpop.f32.mrb[0].mxu0
    %2577 = vdwg.mxu0
    %v2578 = vmul.f32 %v2572, 0.5
    %v2579 = vmul.f32 %v2575, 0.5
    %v2580 = vmul.f32 %v2572, 0.044715
    %v2581 = vmul.f32 %v2575, 0.044715
    %v2582 = vmul.f32 %v2580, %v2572
    %v2583 = vmul.f32 %v2581, %v2575
    %v2584 = vmul.f32 %v2582, %v2572
    %v2585 = vmul.f32 %v2583, %v2575
    %v2586 = vadd.f32 %v2572, %v2584
    %v2587 = vadd.f32 %v2575, %v2585
    %v2588 = vmul.f32 %v2586, 0.7978846
    %v2589 = vmul.f32 %v2587, 0.7978846
    %v2590 = vtanh.pop %v2588
    %v2591 = vtanh.pop %v2589
    %v2592 = vadd.f32 %v2590, 1.0
    %v2593 = vadd.f32 %v2591, 1.0
    %v2594 = vmul.f32 %v2578, %v2592
    %v2595 = vmul.f32 %v2579, %v2593
    %v2596 = vpack.c.bf16 %v2595, %v2594
    %v2597 = vld [vmem:[%s11] sm:$0xf]
    %v2598 = vld [vmem:[%s11 + $0x4] sm:$0xf]
    %v2599 = vld [vmem:[%s11 + $0x8] sm:$0xf]
    %v2600 = vld [vmem:[%s11 + $0xc] sm:$0xf]
    %v2601 = vld [vmem:[%s11 + $0x10] sm:$0xf]
    %v2602 = vld [vmem:[%s11 + $0x14] sm:$0xf]
    %v2603 = vld [vmem:[%s11 + $0x18] sm:$0xf]
    %v2604 = vld [vmem:[%s11 + $0x1c] sm:$0xf]
    %v2605 = vld [vmem:[%s11 + $0x20] sm:$0xf]
    %v2606 = vld [vmem:[%s11 + $0x24] sm:$0xf]
    %v2607 = vld [vmem:[%s11 + $0x28] sm:$0xf]
    %v2608 = vld [vmem:[%s11 + $0x2c] sm:$0xf]
    %v2609 = vld [vmem:[%s11 + $0x30] sm:$0xf]
    %v2610 = vld [vmem:[%s11 + $0x34] sm:$0xf]
    %v2611 = vld [vmem:[%s11 + $0x38] sm:$0xf]
    %v2612 = vld [vmem:[%s11 + $0x3c] sm:$0xf]
    %v2613 = vld [vmem:[%s12] sm:$0x1]
    %v2615 = vlaneseq
    %v2616 = vshrl.u32 %v2615, 7
    %v2617 = vsub.s32 0, %v2616
    %v2618 = vrot.slane %v2613, %v2617
    %v2636 = vunpack.c.l.b16 %v2597
    %v2637 = vunpack.c.l.b16 %v2598
    %v2638 = vunpack.c.l.b16 %v2599
    %v2639 = vunpack.c.l.b16 %v2600
    %v2640 = vunpack.c.l.b16 %v2601
    %v2641 = vunpack.c.l.b16 %v2602
    %v2642 = vunpack.c.l.b16 %v2603
    %v2643 = vunpack.c.l.b16 %v2604
    %v2644 = vunpack.c.l.b16 %v2605
    %v2645 = vunpack.c.l.b16 %v2606
    %v2646 = vunpack.c.l.b16 %v2607
    %v2647 = vunpack.c.l.b16 %v2608
    %v2648 = vunpack.c.l.b16 %v2609
    %v2649 = vunpack.c.l.b16 %v2610
    %v2650 = vunpack.c.l.b16 %v2611
    %v2651 = vunpack.c.l.b16 %v2612
    %v2652 = vpack.c.b16 %v2637, %v2636
    %v2653 = vpack.c.b16 %v2639, %v2638
    %v2654 = vpack.c.b16 %v2641, %v2640
    %v2655 = vpack.c.b16 %v2643, %v2642
    %v2656 = vpack.c.b16 %v2645, %v2644
    %v2657 = vpack.c.b16 %v2647, %v2646
    %v2658 = vpack.c.b16 %v2649, %v2648
    %v2659 = vpack.c.b16 %v2651, %v2650
    %2668 = vmatprep.subr.bf16.mxu0 0
    %2669 = vmatpush1.bf16.msra.mxu0 %v2652
    %2670 = vmatprep.subr.bf16.mxu0 0
    %2671 = vmatpush1.bf16.msra.mxu0 %v2653
    %2672 = vmatprep.subr.bf16.mxu0 0
    %2673 = vmatpush1.bf16.msra.mxu0 %v2654
    %2674 = vmatprep.subr.bf16.mxu0 0
    %2675 = vmatpush1.bf16.msra.mxu0 %v2655
    %2676 = vmatprep.subr.bf16.mxu0 0
    %2677 = vmatpush1.bf16.msra.mxu0 %v2656
    %2678 = vmatprep.subr.bf16.mxu0 0
    %2679 = vmatpush1.bf16.msra.mxu0 %v2657
    %2680 = vmatprep.subr.bf16.mxu0 0
    %2681 = vmatpush1.bf16.msra.mxu0 %v2658
    %2682 = vmatprep.subr.bf16.mxu0 0
    %2683 = vmatpush1.bf16.msra.mxu0 %v2659
    %2684 = vmatprep.subr.bf16.mxu0 0
    %2685 = vmatpush1.bf16.msra.mxu0 0
    %2686 = vmatprep.subr.bf16.mxu0 0
    %2687 = vmatpush1.bf16.msra.mxu0 0
    %2688 = vmatprep.subr.bf16.mxu0 0
    %2689 = vmatpush1.bf16.msra.mxu0 0
    %2690 = vmatprep.subr.bf16.mxu0 0
    %2691 = vmatpush1.bf16.msra.mxu0 0
    %2692 = vmatprep.subr.bf16.mxu0 0
    %2693 = vmatpush1.bf16.msra.mxu0 0
    %2694 = vmatprep.subr.bf16.mxu0 0
    %2695 = vmatpush1.bf16.msra.mxu0 0
    %2696 = vmatprep.subr.bf16.mxu0 0
    %2697 = vmatpush1.bf16.msra.mxu0 0
    %2698 = vmatprep.subr.bf16.mxu0 0
    %2699 = vmatpush1.bf16.msra.mxu0 0
    %2700 = vmatprep.mubr.bf16.mxu0 0
    %2701 = vmatmul.mubr.bf16.gmra.mrb[0].mxu0 %v2596
    %v2702 = vpop.f32.mrb[0].mxu0
    %v2703 = vadd.f32 %v2618, %v2702
    %v2704 = vpop.f32.mrb[0].mxu0
    %v2705 = vpop.f32.mrb[0].mxu0
    %v2706 = vadd.f32 %v2618, %v2705
    %v2707 = vpop.f32.mrb[0].mxu0
    %2708 = vdwg.mxu0
    %v2709 = vadd.f32 %v2464, %v2703
    %v2710 = vadd.f32 %v2465, %v2706
    %2711 = vst.msk [vmem:[#allocation10] sm:$0xff] %vm99, %v2709
    %2712 = vst.msk [vmem:[#allocation10 + $0x8] sm:$0xff] %vm99, %v2710
    // Predicated region
    $region70: #{tpu_custom_call.1} parent=1 // pred_check
      _
    $region71: #{tpu_custom_call.1} parent=1 // pred_check_branch
      %2714 = sbr.rel (0) target = $region73
    $region72: #{tpu_custom_call.1} parent=1 // pred_region
      %s2716 = ssub.s32 256, 256
      %2717 = vsyncadd [#allocation4], %s2716
      %s2718 = sshll.u32 [#allocation10], 4
      %s2719 = int_to_ptr.vmem [resolvable:$true] %s2718
      %2724 = dma.vmem_to_hbm [thread:$0]  %s2719, 256, %s13, [#allocation4], 128, 128, 8
    $region73: #{tpu_custom_call.1} parent=1 // pred_fallthru
      _
    // Predicated region
    $region74: #{tpu_custom_call.1} parent=1 // pred_check
      _
    $region75: #{tpu_custom_call.1} parent=1 // pred_check_branch
      %2726 = sbr.rel (0) target = $region77
    $region76: #{tpu_custom_call.1} parent=1 // pred_region
      %2727 = dma.done [#allocation4], 256
    $region77: #{tpu_custom_call.1} parent=1 // pred_fallthru
      _
    %2728 = vsyncpa [#allocation3], 1
    %2729 = vsyncpa [#allocation6], 1
    %2730 = vsyncpa [#allocation9], 1
    %2731 = vsyncpa [#allocation4], 1

</llo_original>
